<compile_context>
chip_gen: v7x
topology: tpu7x:2x2x1
jax: 0.10.0
libtpu: 0.0.40
codegen_flags: <defaults>
</compile_context>

<pallas_src>
import jax
import jax.numpy as jnp
from jax.experimental import pallas as pl
from jax.experimental.pallas import tpu as pltpu

# Model constants from Mitotic.__init__ (no learned parameters).
V_I = 0.023
V_D = 0.1
K_D = 0.02          # K_d  (Michaelis constant of the C degradation term)
K_D_DEG = 3.3e-3    # k_d  (linear degradation rate of C)
V_M1 = 0.5
V_2 = 0.167
V_M3 = 0.2
V_4 = 0.1
K_C = 0.3
K_1 = 0.1
K_2 = 0.1
K_3 = 0.1
K_4 = 0.1
SCALE = 5.0

_LANE_QUANTUM = 384     # lcm(3, 128): triple-aligned and lane-dense
_COL_CAP = 3072         # max column tile (multiple of 384)
_ROW_CAP = 256          # max row tile


def _mitotic_kernel(s_ref, d_ref):
    S = s_ref[...].astype(jnp.float32)      # (TB, T), interleaved C,M,X triples
    T = S.shape[-1]                         # static tile width; T % 3 == 0

    # Lane-class machinery at shape (1, T) only; broadcast into the (TB, T) math.
    lane = jax.lax.broadcasted_iota(jnp.int32, (1, T), 1)
    mod3 = lane % 3
    is_c = mod3 == 0
    is_m = mod3 == 1

    def pick(cv, mv, xv):
        return jnp.where(is_c, jnp.float32(cv),
                         jnp.where(is_m, jnp.float32(mv), jnp.float32(xv)))

    self_off = pick(0.125, 0.4, 0.3)      # offset for this lane's own species
    other_off = pick(0.3, 0.125, 0.4)     # offset for the neighbour it reads
    a0 = pick(V_I, 0.0, 0.0)
    c1 = pick(V_D, V_M1, V_M3)
    s1 = pick(0.0, 1.0, 1.0)
    g1 = pick(1.0, K_C, 1.0)
    h1 = pick(0.0, 1.0, 0.0)
    e1 = pick(K_D, K_1 + 1.0, K_3 + 1.0)
    e2 = pick(1.0, -1.0, -1.0)
    c2 = pick(K_D_DEG, V_2, V_4)
    k2 = pick(1.0, K_2, K_4)
    m2 = pick(0.0, 1.0, 1.0)

    # Each lane needs exactly ONE neighbour of its own triple:
    #   C lane (i%3==0) reads X at lane i+2; M/X lanes read C/M at lane i-1.
    # Two static lane rotations (XLU).  Wrapped lanes are never selected:
    # T % 3 == 0, C lanes pick next2 (never wraps for i <= T-3) and non-C lanes
    # pick prev1 (only wraps at lane 0, which is a C lane).
    prev1 = pltpu.roll(S, 1, 1)        # value from lane i-1
    next2 = pltpu.roll(S, T - 2, 1)    # value from lane i+2
    other = jnp.where(is_c, next2, prev1)

    inv_scale = 1.0 / SCALE
    u = S * inv_scale + self_off       # this lane's own species (C, M or X)
    w = other * inv_scale + other_off  # the neighbour species it depends on

    # Generic per-lane form  d = a0 + num1/den1 - num2/den2:
    #   C: v_i - v_d*X*C/(K_d+C)                    - k_d*C
    #   M: V_M1*C*(1-M)/((K_C+C)*(K_1+1-M))          - V_2*M/(K_2+M)
    #   X: V_M3*M*(1-X)/(K_3+1-X)                    - V_4*X/(K_4+X)
    num1 = c1 * w * (s1 - u)
    den1 = (g1 + h1 * w) * (e1 + e2 * u)
    num2 = c2 * u
    den2 = k2 + m2 * u

    # Fuse the two divides into one (den2 == 1 on C lanes, so the extra
    # multiplies are cheap); one divide chain per lane instead of two.
    d = a0 + (num1 * den2 - num2 * den1) / (den1 * den2)
    d_ref[...] = (d * SCALE).astype(d_ref.dtype)


def _round_up(x, m):
    return -(-x // m) * m


def _pick_col_tile(L):
    """Column tile: always a multiple of 384 (rolls stay lane/triple aligned)
    and <= _COL_CAP.  Ragged right edges are handled by the cdiv grid + Pallas
    edge masking, never by wrapper padding.  Caller guarantees L >= 384."""
    if L <= _COL_CAP:
        if L % _LANE_QUANTUM == 0:
            return L
        return (L // _LANE_QUANTUM) * _LANE_QUANTUM
    t = _COL_CAP
    while t >= _LANE_QUANTUM:
        if L % t == 0:
            return t if 2 * t >= _COL_CAP else _COL_CAP
        t -= _LANE_QUANTUM
    return _COL_CAP


def _pick_row_tile(B, row_q):
    if B <= row_q:
        return B                        # block row dim == full array dim (legal)
    return min(_ROW_CAP, (B // row_q) * row_q)


def mitotic_forward(t, state):
    """Equivalent of Mitotic.forward(t, state); `t` unused (autonomous ODE)."""
    del t
    B, L = state.shape
    if L % 3 != 0:
        raise ValueError("last dim must be divisible by 3 (C, M, X triples)")

    itemsize = jnp.dtype(state.dtype).itemsize
    row_q = max(8, 32 // max(itemsize, 1))      # dtype-aware sublane quantum

    # Only truly tiny inputs (L < 384) get wrapper padding; everything else is
    # streamed in place (read once / written once) with ragged edges handled by
    # the cdiv grid + Pallas edge masking.
    x = state
    Lk = L
    if L < _LANE_QUANTUM:
        Lk = _LANE_QUANTUM
        x = jnp.pad(state, ((0, 0), (0, Lk - L)))

    tl = _pick_col_tile(Lk)
    tb = _pick_row_tile(B, row_q)

    # Guarantee >= 2 grid blocks whenever possible so both of v7x's TensorCores
    # get work (neutral on single-core v5e/v6e).
    if pl.cdiv(B, tb) * pl.cdiv(Lk, tl) == 1:
        if B > row_q:
            tb = _round_up(pl.cdiv(B, 2), row_q)
        elif Lk >= 2 * _LANE_QUANTUM:
            tl = _round_up(pl.cdiv(Lk, 2), _LANE_QUANTUM)

    grid = (pl.cdiv(B, tb), pl.cdiv(Lk, tl))
    spec = pl.BlockSpec((tb, tl), lambda i, j: (i, j))

    compiler_kwargs = dict(dimension_semantics=("parallel", "parallel"))
    block_f32 = tb * tl * 4
    if block_f32 > (1 << 20):
        # Large streaming tiles: raise the scoped-VMEM cap so double-buffered
        # in/out blocks plus the roll temporaries fit on every generation
        # (v5e's default scoped limit is only 16 MiB; physical VMEM is
        # >= 64 MiB on v5e/v6e/v7x so this request is always safe).
        compiler_kwargs["vmem_limit_bytes"] = int(
            min(60 << 20, max(32 << 20, 16 * block_f32)))

    n = B * L
    out = pl.pallas_call(
        _mitotic_kernel,
        out_shape=jax.ShapeDtypeStruct((B, Lk), state.dtype),
        grid=grid,
        in_specs=[spec],
        out_specs=spec,
        compiler_params=pltpu.CompilerParams(**compiler_kwargs),
        cost_estimate=pl.CostEstimate(
            flops=25 * n, transcendentals=n, bytes_accessed=2 * n * itemsize),
    )(x)

    if Lk != L:
        out = out[:, :L]
    return out


def _reference(t, state):
    """Pure-JAX reference mirroring the PyTorch forward exactly."""
    del t
    L = state.shape[1]
    C = state[:, 0:L:3] / SCALE + 0.125
    M = state[:, 1:L:3] / SCALE + 0.4
    X = state[:, 2:L:3] / SCALE + 0.3
    dC = V_I - V_D * X * C / (K_D + C) - K_D_DEG * C
    dM = C / (K_C + C) * V_M1 * (1.0 - M) / (K_1 + 1.0 - M) - V_2 * M / (K_2 + M)
    dX = V_M3 * M * (1.0 - X) / (K_3 + 1.0 - X) - V_4 * X / (K_4 + X)
    d = jnp.zeros_like(state)
    d = d.at[:, 0:L:3].set(dC).at[:, 1:L:3].set(dM).at[:, 2:L:3].set(dX)
    return d * SCALE


if __name__ == "__main__":
    key = jax.random.PRNGKey(0)
    k1, k2, k3 = jax.random.split(key, 3)
    t0 = jnp.float32(0.0)

    def check(s, name):
        o = jax.block_until_ready(mitotic_forward(t0, s))
        r = _reference(t0, s)
        assert o.shape == s.shape and o.dtype == s.dtype, name
        assert jnp.allclose(o, r, atol=1e-5, rtol=1e-5), name + " mismatch vs ref"

    # Case 1: multi-row-block grid (v7x split path) with a ragged row edge:
    # (2, 1) grid of (16, 2304) blocks over a (24, 2304) array.
    check(jax.random.normal(k1, (24, 2304), dtype=jnp.float32) * 0.1, "case1")

    # Case 2: ragged column edge: (1, 2) grid of (5, 768) blocks over (5, 1152);
    # the last block's out-of-bounds lanes hold garbage and must not leak.
    check(jax.random.normal(k2, (5, 1152), dtype=jnp.float32) * 0.1, "case2")

    # Case 3: tiny / odd shape — exercises the pad-to-384 fallback.
    check(jax.random.normal(k3, (2, 24), dtype=jnp.float32) * 0.1, "case3")

    print("KERNEL_OK")
</pallas_src>

<mosaic_0001>
module attributes {stable_mosaic.version = 11 : i64} {
  func.func @_mitotic_kernel(%arg0: i32, %arg1: i32, %arg2: memref<16x2304xf32, #tpu.memory_space<vmem>>, %arg3: memref<16x2304xf32, #tpu.memory_space<vmem>>) attributes {dimension_semantics = [#tpu.dimension_semantics<parallel>, #tpu.dimension_semantics<parallel>], iteration_bounds = array<i64: 2, 1>, scalar_prefetch = 0 : i64, scratch_operands = 0 : i64, tpu.core_type = #tpu.core_type<tc>, window_params = [{transform_indices = @transform_0, window_bounds = array<i64: 16, 2304>}, {transform_indices = @transform_1, window_bounds = array<i64: 16, 2304>}]} {
    %c0 = arith.constant 0 : index
    %c0_0 = arith.constant 0 : index
    %0 = vector.load %arg2[%c0, %c0_0] : memref<16x2304xf32, #tpu.memory_space<vmem>>, vector<16x2304xf32>
    %1 = tpu.iota {dimensions = array<i32: 1>} : vector<1x2304xi32>
    %c3_i32 = arith.constant 3 : i32
    %c0_i32 = arith.constant 0 : i32
    %2 = arith.cmpi eq, %c3_i32, %c0_i32 : i32
    %c1_i32 = arith.constant 1 : i32
    %3 = arith.select %2, %c1_i32, %c3_i32 : i32
    %4 = vector.broadcast %3 : i32 to vector<1x2304xi32>
    %5 = arith.remsi %1, %4 : vector<1x2304xi32>
    %c0_i32_1 = arith.constant 0 : i32
    %6 = vector.broadcast %c0_i32_1 : i32 to vector<1x2304xi32>
    %7 = arith.cmpi ne, %5, %6 : vector<1x2304xi32>
    %c0_i32_2 = arith.constant 0 : i32
    %8 = vector.broadcast %c0_i32_2 : i32 to vector<1x2304xi32>
    %9 = arith.cmpi slt, %5, %8 : vector<1x2304xi32>
    %c0_i32_3 = arith.constant 0 : i32
    %10 = arith.cmpi slt, %3, %c0_i32_3 : i32
    %11 = vector.broadcast %10 : i1 to vector<1x2304xi1>
    %12 = vector.broadcast %11 : vector<1x2304xi1> to vector<1x2304xi1>
    %13 = arith.xori %9, %12 : vector<1x2304xi1>
    %14 = arith.andi %13, %7 : vector<1x2304xi1>
    %15 = vector.broadcast %3 : i32 to vector<1x2304xi32>
    %16 = arith.addi %5, %15 : vector<1x2304xi32>
    %17 = arith.select %14, %16, %5 : vector<1x2304xi1>, vector<1x2304xi32>
    %c0_i32_4 = arith.constant 0 : i32
    %18 = vector.broadcast %c0_i32_4 : i32 to vector<1x2304xi32>
    %19 = arith.cmpi eq, %17, %18 : vector<1x2304xi32>
    %c1_i32_5 = arith.constant 1 : i32
    %20 = vector.broadcast %c1_i32_5 : i32 to vector<1x2304xi32>
    %21 = arith.cmpi eq, %17, %20 : vector<1x2304xi32>
    %cst = arith.constant 4.000000e-01 : f32
    %cst_6 = arith.constant 3.000000e-01 : f32
    %22 = vector.broadcast %cst : f32 to vector<1x2304xf32>
    %23 = vector.broadcast %cst_6 : f32 to vector<1x2304xf32>
    %24 = arith.select %21, %22, %23 : vector<1x2304xi1>, vector<1x2304xf32>
    %cst_7 = arith.constant 1.250000e-01 : f32
    %25 = vector.broadcast %cst_7 : f32 to vector<1x2304xf32>
    %26 = arith.select %19, %25, %24 : vector<1x2304xi1>, vector<1x2304xf32>
    %cst_8 = arith.constant 1.250000e-01 : f32
    %cst_9 = arith.constant 4.000000e-01 : f32
    %27 = vector.broadcast %cst_8 : f32 to vector<1x2304xf32>
    %28 = vector.broadcast %cst_9 : f32 to vector<1x2304xf32>
    %29 = arith.select %21, %27, %28 : vector<1x2304xi1>, vector<1x2304xf32>
    %cst_10 = arith.constant 3.000000e-01 : f32
    %30 = vector.broadcast %cst_10 : f32 to vector<1x2304xf32>
    %31 = arith.select %19, %30, %29 : vector<1x2304xi1>, vector<1x2304xf32>
    %cst_11 = arith.constant 0.000000e+00 : f32
    %cst_12 = arith.constant 0.000000e+00 : f32
    %32 = vector.broadcast %cst_11 : f32 to vector<1x2304xf32>
    %33 = vector.broadcast %cst_12 : f32 to vector<1x2304xf32>
    %34 = arith.select %21, %32, %33 : vector<1x2304xi1>, vector<1x2304xf32>
    %cst_13 = arith.constant 2.300000e-02 : f32
    %35 = vector.broadcast %cst_13 : f32 to vector<1x2304xf32>
    %36 = arith.select %19, %35, %34 : vector<1x2304xi1>, vector<1x2304xf32>
    %cst_14 = arith.constant 5.000000e-01 : f32
    %cst_15 = arith.constant 2.000000e-01 : f32
    %37 = vector.broadcast %cst_14 : f32 to vector<1x2304xf32>
    %38 = vector.broadcast %cst_15 : f32 to vector<1x2304xf32>
    %39 = arith.select %21, %37, %38 : vector<1x2304xi1>, vector<1x2304xf32>
    %cst_16 = arith.constant 1.000000e-01 : f32
    %40 = vector.broadcast %cst_16 : f32 to vector<1x2304xf32>
    %41 = arith.select %19, %40, %39 : vector<1x2304xi1>, vector<1x2304xf32>
    %cst_17 = arith.constant 1.000000e+00 : f32
    %cst_18 = arith.constant 1.000000e+00 : f32
    %42 = vector.broadcast %cst_17 : f32 to vector<1x2304xf32>
    %43 = vector.broadcast %cst_18 : f32 to vector<1x2304xf32>
    %44 = arith.select %21, %42, %43 : vector<1x2304xi1>, vector<1x2304xf32>
    %cst_19 = arith.constant 0.000000e+00 : f32
    %45 = vector.broadcast %cst_19 : f32 to vector<1x2304xf32>
    %46 = arith.select %19, %45, %44 : vector<1x2304xi1>, vector<1x2304xf32>
    %cst_20 = arith.constant 3.000000e-01 : f32
    %cst_21 = arith.constant 1.000000e+00 : f32
    %47 = vector.broadcast %cst_20 : f32 to vector<1x2304xf32>
    %48 = vector.broadcast %cst_21 : f32 to vector<1x2304xf32>
    %49 = arith.select %21, %47, %48 : vector<1x2304xi1>, vector<1x2304xf32>
    %cst_22 = arith.constant 1.000000e+00 : f32
    %50 = vector.broadcast %cst_22 : f32 to vector<1x2304xf32>
    %51 = arith.select %19, %50, %49 : vector<1x2304xi1>, vector<1x2304xf32>
    %cst_23 = arith.constant 1.000000e+00 : f32
    %cst_24 = arith.constant 0.000000e+00 : f32
    %52 = vector.broadcast %cst_23 : f32 to vector<1x2304xf32>
    %53 = vector.broadcast %cst_24 : f32 to vector<1x2304xf32>
    %54 = arith.select %21, %52, %53 : vector<1x2304xi1>, vector<1x2304xf32>
    %cst_25 = arith.constant 0.000000e+00 : f32
    %55 = vector.broadcast %cst_25 : f32 to vector<1x2304xf32>
    %56 = arith.select %19, %55, %54 : vector<1x2304xi1>, vector<1x2304xf32>
    %cst_26 = arith.constant 1.100000e+00 : f32
    %cst_27 = arith.constant 1.100000e+00 : f32
    %57 = vector.broadcast %cst_26 : f32 to vector<1x2304xf32>
    %58 = vector.broadcast %cst_27 : f32 to vector<1x2304xf32>
    %59 = arith.select %21, %57, %58 : vector<1x2304xi1>, vector<1x2304xf32>
    %cst_28 = arith.constant 2.000000e-02 : f32
    %60 = vector.broadcast %cst_28 : f32 to vector<1x2304xf32>
    %61 = arith.select %19, %60, %59 : vector<1x2304xi1>, vector<1x2304xf32>
    %cst_29 = arith.constant -1.000000e+00 : f32
    %cst_30 = arith.constant -1.000000e+00 : f32
    %62 = vector.broadcast %cst_29 : f32 to vector<1x2304xf32>
    %63 = vector.broadcast %cst_30 : f32 to vector<1x2304xf32>
    %64 = arith.select %21, %62, %63 : vector<1x2304xi1>, vector<1x2304xf32>
    %cst_31 = arith.constant 1.000000e+00 : f32
    %65 = vector.broadcast %cst_31 : f32 to vector<1x2304xf32>
    %66 = arith.select %19, %65, %64 : vector<1x2304xi1>, vector<1x2304xf32>
    %cst_32 = arith.constant 1.670000e-01 : f32
    %cst_33 = arith.constant 1.000000e-01 : f32
    %67 = vector.broadcast %cst_32 : f32 to vector<1x2304xf32>
    %68 = vector.broadcast %cst_33 : f32 to vector<1x2304xf32>
    %69 = arith.select %21, %67, %68 : vector<1x2304xi1>, vector<1x2304xf32>
    %cst_34 = arith.constant 3.300000e-03 : f32
    %70 = vector.broadcast %cst_34 : f32 to vector<1x2304xf32>
    %71 = arith.select %19, %70, %69 : vector<1x2304xi1>, vector<1x2304xf32>
    %cst_35 = arith.constant 1.000000e-01 : f32
    %cst_36 = arith.constant 1.000000e-01 : f32
    %72 = vector.broadcast %cst_35 : f32 to vector<1x2304xf32>
    %73 = vector.broadcast %cst_36 : f32 to vector<1x2304xf32>
    %74 = arith.select %21, %72, %73 : vector<1x2304xi1>, vector<1x2304xf32>
    %cst_37 = arith.constant 1.000000e+00 : f32
    %75 = vector.broadcast %cst_37 : f32 to vector<1x2304xf32>
    %76 = arith.select %19, %75, %74 : vector<1x2304xi1>, vector<1x2304xf32>
    %cst_38 = arith.constant 1.000000e+00 : f32
    %cst_39 = arith.constant 1.000000e+00 : f32
    %77 = vector.broadcast %cst_38 : f32 to vector<1x2304xf32>
    %78 = vector.broadcast %cst_39 : f32 to vector<1x2304xf32>
    %79 = arith.select %21, %77, %78 : vector<1x2304xi1>, vector<1x2304xf32>
    %cst_40 = arith.constant 0.000000e+00 : f32
    %80 = vector.broadcast %cst_40 : f32 to vector<1x2304xf32>
    %81 = arith.select %19, %80, %79 : vector<1x2304xi1>, vector<1x2304xf32>
    %c1_i32_41 = arith.constant 1 : i32
    %82 = tpu.dynamic_rotate %0 by %c1_i32_41 dim 1 : vector<16x2304xf32>, i32 -> vector<16x2304xf32>
    %c2302_i32 = arith.constant 2302 : i32
    %83 = tpu.dynamic_rotate %0 by %c2302_i32 dim 1 : vector<16x2304xf32>, i32 -> vector<16x2304xf32>
    %84 = vector.shape_cast %19 : vector<1x2304xi1> to vector<1x2304xi1>
    %85 = vector.broadcast %84 : vector<1x2304xi1> to vector<16x2304xi1>
    %86 = arith.select %85, %83, %82 : vector<16x2304xi1>, vector<16x2304xf32>
    %cst_42 = arith.constant 2.000000e-01 : f32
    %87 = vector.broadcast %cst_42 : f32 to vector<16x2304xf32>
    %88 = arith.mulf %0, %87 : vector<16x2304xf32>
    %89 = vector.broadcast %26 : vector<1x2304xf32> to vector<16x2304xf32>
    %90 = arith.addf %88, %89 : vector<16x2304xf32>
    %cst_43 = arith.constant 2.000000e-01 : f32
    %91 = vector.broadcast %cst_43 : f32 to vector<16x2304xf32>
    %92 = arith.mulf %86, %91 : vector<16x2304xf32>
    %93 = vector.broadcast %31 : vector<1x2304xf32> to vector<16x2304xf32>
    %94 = arith.addf %92, %93 : vector<16x2304xf32>
    %95 = vector.broadcast %41 : vector<1x2304xf32> to vector<16x2304xf32>
    %96 = arith.mulf %95, %94 : vector<16x2304xf32>
    %97 = vector.broadcast %46 : vector<1x2304xf32> to vector<16x2304xf32>
    %98 = arith.subf %97, %90 : vector<16x2304xf32>
    %99 = arith.mulf %96, %98 : vector<16x2304xf32>
    %100 = vector.broadcast %56 : vector<1x2304xf32> to vector<16x2304xf32>
    %101 = arith.mulf %100, %94 : vector<16x2304xf32>
    %102 = vector.broadcast %51 : vector<1x2304xf32> to vector<16x2304xf32>
    %103 = arith.addf %102, %101 : vector<16x2304xf32>
    %104 = vector.broadcast %66 : vector<1x2304xf32> to vector<16x2304xf32>
    %105 = arith.mulf %104, %90 : vector<16x2304xf32>
    %106 = vector.broadcast %61 : vector<1x2304xf32> to vector<16x2304xf32>
    %107 = arith.addf %106, %105 : vector<16x2304xf32>
    %108 = arith.mulf %103, %107 : vector<16x2304xf32>
    %109 = vector.broadcast %71 : vector<1x2304xf32> to vector<16x2304xf32>
    %110 = arith.mulf %109, %90 : vector<16x2304xf32>
    %111 = vector.broadcast %81 : vector<1x2304xf32> to vector<16x2304xf32>
    %112 = arith.mulf %111, %90 : vector<16x2304xf32>
    %113 = vector.broadcast %76 : vector<1x2304xf32> to vector<16x2304xf32>
    %114 = arith.addf %113, %112 : vector<16x2304xf32>
    %115 = arith.mulf %99, %114 : vector<16x2304xf32>
    %116 = arith.mulf %110, %108 : vector<16x2304xf32>
    %117 = arith.subf %115, %116 : vector<16x2304xf32>
    %118 = arith.mulf %108, %114 : vector<16x2304xf32>
    %119 = arith.divf %117, %118 : vector<16x2304xf32>
    %120 = vector.broadcast %36 : vector<1x2304xf32> to vector<16x2304xf32>
    %121 = arith.addf %120, %119 : vector<16x2304xf32>
    %cst_44 = arith.constant 5.000000e+00 : f32
    %122 = vector.broadcast %cst_44 : f32 to vector<16x2304xf32>
    %123 = arith.mulf %121, %122 : vector<16x2304xf32>
    %c0_45 = arith.constant 0 : index
    %c0_46 = arith.constant 0 : index
    %124 = vector.load %arg3[%c0_45, %c0_46] : memref<16x2304xf32, #tpu.memory_space<vmem>>, vector<16x2304xf32>
    tpu.vector_store %arg3[%c0_45, %c0_46], %123 {strides = array<i32>} : memref<16x2304xf32, #tpu.memory_space<vmem>>, vector<16x2304xf32>,
    return
  }
  func.func @transform_0(%arg0: i32, %arg1: i32) -> (i32, i32) {
    %c0_i32 = arith.constant 0 : i32
    return %arg0, %arg1 : i32, i32
  }
  func.func @transform_1(%arg0: i32, %arg1: i32) -> (i32, i32) {
    %c0_i32 = arith.constant 0 : i32
    return %arg0, %arg1 : i32, i32
  }
}

</mosaic_0001>

<llo_original>
// kernel: tpu_custom_call.1
$region0: #{tpu_custom_call.1}
  #allocation0 [shape = 'u32[]', space=smem, size = 0x4, offset = 0x4, fixed_abs, tag = 'smem constant byte address 0x4 - core index']
  #allocation1 [shape = 'u32[144,128]{1,0:T(1,128)}', space=vmem, size = 0x12000, scoped, tag = 'internal scratch']
  %s0 = inlined_call_operand.hbm [shape: f32[24,2304], index: 0, kind: input, shape index: {}]
  %s1 = inlined_call_operand.hbm [shape: f32[24,2304], index: 1, kind: output, shape index: {}]
  %s2 = sld [smem:[#allocation0]]
  $region41: #{tpu_custom_call.1} parent=0
    _
  %s4 = ssub.s32 1, %s2
  %s5 = scalar_select 0, %s4, %s2
  $region1: #{tpu_custom_call.1} parent=0
    #allocation2 [shape = 'u8[294912]{0}', space=vmem, size = 0x48000, scoped, tag = 'input window, operand 0']
    #allocation3 [shape = 's32[2]{0}', space=sflag, size = 0x8, scoped, tag = 'scoped memory for tpu_custom_call.1']
    #allocation4 [shape = 's32[2]{0}', space=sflag, size = 0x8, scoped, tag = 'scoped memory for tpu_custom_call.1']
    #allocation5 [shape = 'u8[294912]{0}', space=vmem, size = 0x48000, scoped, tag = 'output window, operand 0']
    %6 = vsyncpa [#allocation3], 0
    %s7 = scalar_lea.sflag [#allocation3], 1
    %8 = vsyncpa %s7, 0
    %9 = vsyncpa [#allocation4], 0
    %s10 = scalar_lea.sflag [#allocation4], 1
    %11 = vsyncpa %s10, 0
    loop: start=0, step=1, limit=4
    $region2: #{tpu_custom_call.1} parent=1 // loop_pre_header
      _
    $region3: #{tpu_custom_call.1} parent=1 // loop_header
      %s13 = sphi 0, %s17
      %p14 = scmp.ge.s32.totalorder %s13, 4
      %s20 = sphi 0, %s32
      %s21 = sphi 0, %s28
      %s22 = sphi 0, %s20
      %s23 = sphi 0, %s21
      %s24 = sphi 0, %s22
      %s25 = sphi 0, %s23
      %s37 = sphi 0, %s39
      %s40 = sphi 0, %s37
      %s41 = sphi 0, %s40
      %s57 = sphi 0, %s41
      %s65 = sphi 0, %s67
      %s68 = sphi 0, %s65
      %s69 = sphi 0, %s68
      %s85 = sphi 0, %s69
    $region4: #{tpu_custom_call.1} parent=1 // loop_header_branch
      %16 = sbr.rel (%p14) target = $region8
    $region5: #{tpu_custom_call.1} parent=1 // loop_body
      %s18 = ssub.s32 %s13, 1
      %s19 = ssub.s32 %s13, 2
      %s26 = sadd.s32 1, %s21
      %p27 = scmp.ge.s32.totalorder %s26, 1
      %s28 = scalar_select %p27, 0, %s26
      %s29 = sadd.s32 1, %s20
      %s30 = scalar_select %p27, %s29, %s20
      %p31 = scmp.ge.s32.totalorder %s30, 2
      %s32 = scalar_select %p31, 0, %s30
      %s33 = ssub.s32 %s20, %s32
      %s34 = ssub.s32 %s21, %s28
      %s35 = sor.u32 %s33, %s34
      %p36 = scmp.eq.s32.totalorder %s35, 0
      %s38 = sadd.s32 %s37, 1
      %s39 = scalar_select %p36, %s37, %s38
      %p42 = pneg %p36
      %p43 = scmp.eq.s32.totalorder %s13, 1
      %p44 = por %p42, %p43
      %p45 = scmp.ne.s32.totalorder %s37, %s40
      %p46 = scmp.eq.s32.totalorder %s13, 0
      %p47 = por %p45, %p46
      %p48 = scmp.ne.s32.totalorder %s37, %s40
      %p49 = scmp.eq.s32.totalorder %s18, 1
      %p50 = por %p48, %p49
      %p51 = scmp.ne.s32.totalorder %s40, %s41
      %p52 = scmp.eq.s32.totalorder %s18, 0
      %p53 = por %p51, %p52
      %p54 = scmp.ne.s32.totalorder %s40, %s41
      %p55 = scmp.eq.s32.totalorder %s19, 1
      %p56 = por %p54, %p55
      %p58 = scmp.ne.s32.totalorder %s41, %s57
      %p59 = scmp.eq.s32.totalorder %s19, 0
      %p60 = por %p58, %p59
      %s61 = ssub.s32 %s20, %s32
      %s62 = ssub.s32 %s21, %s28
      %s63 = sor.u32 %s61, %s62
      %p64 = scmp.eq.s32.totalorder %s63, 0
      %s66 = sadd.s32 %s65, 1
      %s67 = scalar_select %p64, %s65, %s66
      %p70 = pneg %p64
      %p71 = scmp.eq.s32.totalorder %s13, 1
      %p72 = por %p70, %p71
      %p73 = scmp.ne.s32.totalorder %s65, %s68
      %p74 = scmp.eq.s32.totalorder %s13, 0
      %p75 = por %p73, %p74
      %p76 = scmp.ne.s32.totalorder %s65, %s68
      %p77 = scmp.eq.s32.totalorder %s18, 1
      %p78 = por %p76, %p77
      %p79 = scmp.ne.s32.totalorder %s68, %s69
      %p80 = scmp.eq.s32.totalorder %s18, 0
      %p81 = por %p79, %p80
      %p82 = scmp.ne.s32.totalorder %s68, %s69
      %p83 = scmp.eq.s32.totalorder %s19, 1
      %p84 = por %p82, %p83
      %p86 = scmp.ne.s32.totalorder %s69, %s85
      %p87 = scmp.eq.s32.totalorder %s19, 0
      %p88 = por %p86, %p87
      %p89 = scmp.le.s32.totalorder 1, %s13
      %p90 = scmp.lt.s32.totalorder %s13, 3
      %p91 = pnand %p89, %p90
      %p92 = pneg %p91
      // Predicated region
      $region9: #{tpu_custom_call.1} parent=5 // pred_check
        _
      $region10: #{tpu_custom_call.1} parent=5 // pred_check_branch
        %94 = sbr.rel (%p91) target = $region12
      $region11: #{tpu_custom_call.1} parent=5 // pred_region
        %s95 = ssub.s32 %s13, 1
      $region12: #{tpu_custom_call.1} parent=5 // pred_fallthru
        _
      %p96 = scmp.lt.s32.totalorder %s13, 2
      // Predicated region
      $region13: #{tpu_custom_call.1} parent=5 // pred_check
        %p97 = pneg %p96
      $region14: #{tpu_custom_call.1} parent=5 // pred_check_branch
        %99 = sbr.rel (%p97) target = $region16
      $region15: #{tpu_custom_call.1} parent=5 // pred_region
        // Predicated region
        $region17: #{tpu_custom_call.1} parent=15 // pred_check
          %p100 = pneg %p47
        $region18: #{tpu_custom_call.1} parent=15 // pred_check_branch
          %102 = sbr.rel (%p100) target = $region20
        $region19: #{tpu_custom_call.1} parent=15 // pred_region
          %s103 = sand.u32 %s37, 1
          %s104 = scalar_lea.sflag [#allocation3], %s103
          %s105 = sand.u32 %s37, 1
          %s106 = smul.addr %s105, 288
          %s107 = scalar_lea.vmem [#allocation2], %s106
          %s108 = smul.u32 2, %s20
          %s109 = smul.u32 18, %s21
          %s110 = ssub.s32 3, %s108
          %p111 = scmp.lt.s32.totalorder %s110, 2
          %s112 = scalar_select %p111, %s110, 2
          %s113 = smul.u32 128, %s112
          %s114 = smul.u32 %s113, 18
          %s116 = ssub.s32 4608, %s114
          %117 = vsyncadd %s104, %s116
          %p118 = scmp.ne.s32.totalorder 0, %s114
          %s119 = smul.addr %s108, 18
          %s120 = sadd.s32 %s109, %s119
          %s121 = smul.addr %s120, 128
          %s122 = scalar_lea.hbm %s0, %s121
          %s123 = smul.u32 144, %s112
          %s124 = sshll.u32 %s107, 4
          %s125 = int_to_ptr.vmem [resolvable:$true] %s124
          %s126 = sshll.u32 %s123, 4
          %130 = dma.hbm_to_vmem [thread:$0]  (%p118), %s122, %s126, %s125, %s104, 2304, 2304, 144
        $region20: #{tpu_custom_call.1} parent=15 // pred_fallthru
          _
      $region16: #{tpu_custom_call.1} parent=5 // pred_fallthru
        _
      %p131 = scmp.le.s32.totalorder 1, %s13
      %p132 = scmp.lt.s32.totalorder %s13, 3
      %p133 = pnand %p131, %p132
      %p134 = pneg %p133
      // Predicated region
      $region21: #{tpu_custom_call.1} parent=5 // pred_check
        _
      $region22: #{tpu_custom_call.1} parent=5 // pred_check_branch
        %136 = sbr.rel (%p133) target = $region24
      $region23: #{tpu_custom_call.1} parent=5 // pred_region
        %s137 = ssub.s32 %s13, 1
        %s138 = sand.u32 %s40, 1
        %s139 = scalar_lea.sflag [#allocation3], %s138
        %s140 = sand.u32 %s40, 1
        %s141 = smul.addr %s140, 288
        %s142 = scalar_lea.vmem [#allocation2], %s141
        // Predicated region
        $region25: #{tpu_custom_call.1} parent=23 // pred_check
          %p143 = pneg %p53
        $region26: #{tpu_custom_call.1} parent=23 // pred_check_branch
          %145 = sbr.rel (%p143) target = $region28
        $region27: #{tpu_custom_call.1} parent=23 // pred_region
          %146 = dma.done %s139, 4608
        $region28: #{tpu_custom_call.1} parent=23 // pred_fallthru
          _
        %s147 = sand.u32 %s40, 1
        %s148 = scalar_lea.sflag [#allocation3], %s147
        %s149 = sand.u32 %s40, 1
        %s150 = smul.addr %s149, 288
        %s151 = scalar_lea.vmem [#allocation2], %s150
        %p152 = pneg %p53
        %p153 = pneg %p50
        %p154 = pneg %p81
        %p155 = pneg %p78
        %s156 = sand.u32 %s68, 1
        %s157 = scalar_lea.sflag [#allocation4], %s156
        %s158 = sand.u32 %s68, 1
        %s159 = smul.addr %s158, 288
        %s160 = scalar_lea.vmem [#allocation5], %s159
        %s161 = smul.u32 2, %s22
        %s162 = smul.u32 18, %s23
        %s163 = ssub.s32 3, %s161
        %p164 = scmp.lt.s32.totalorder %s163, 2
        %s165 = scalar_select %p164, %s163, 2
        %s166 = smul.u32 128, %s165
        %s167 = smul.u32 %s166, 18
        %s168 = smul.u32 2, %s22
        %s169 = smul.u32 18, %s23
        %s170 = ssub.s32 3, %s168
        %p171 = scmp.lt.s32.totalorder %s170, 2
        %s172 = scalar_select %p171, %s170, 2
        %s173 = smul.u32 128, %s172
        %s174 = smul.u32 %s173, 18
        %v175 = vld [vmem:[%s142] sm:$0xff]
        %v176 = vld [vmem:[%s142 + $0x8] sm:$0xff]
        %v177 = vld [vmem:[%s142 + $0x10] sm:$0xff]
        %v178 = vld [vmem:[%s142 + $0x18] sm:$0xff]
        %v179 = vld [vmem:[%s142 + $0x20] sm:$0xff]
        %v180 = vld [vmem:[%s142 + $0x28] sm:$0xff]
        %v181 = vld [vmem:[%s142 + $0x30] sm:$0xff]
        %v182 = vld [vmem:[%s142 + $0x38] sm:$0xff]
        %v183 = vld [vmem:[%s142 + $0x40] sm:$0xff]
        %v184 = vld [vmem:[%s142 + $0x48] sm:$0xff]
        %v185 = vld [vmem:[%s142 + $0x50] sm:$0xff]
        %v186 = vld [vmem:[%s142 + $0x58] sm:$0xff]
        %v187 = vld [vmem:[%s142 + $0x60] sm:$0xff]
        %v188 = vld [vmem:[%s142 + $0x68] sm:$0xff]
        %v189 = vld [vmem:[%s142 + $0x70] sm:$0xff]
        %v190 = vld [vmem:[%s142 + $0x78] sm:$0xff]
        %v191 = vld [vmem:[%s142 + $0x80] sm:$0xff]
        %v192 = vld [vmem:[%s142 + $0x88] sm:$0xff]
        %v193 = vld [vmem:[%s142 + $0x90] sm:$0xff]
        %v194 = vld [vmem:[%s142 + $0x98] sm:$0xff]
        %v195 = vld [vmem:[%s142 + $0xa0] sm:$0xff]
        %v196 = vld [vmem:[%s142 + $0xa8] sm:$0xff]
        %v197 = vld [vmem:[%s142 + $0xb0] sm:$0xff]
        %v198 = vld [vmem:[%s142 + $0xb8] sm:$0xff]
        %v199 = vld [vmem:[%s142 + $0xc0] sm:$0xff]
        %v200 = vld [vmem:[%s142 + $0xc8] sm:$0xff]
        %v201 = vld [vmem:[%s142 + $0xd0] sm:$0xff]
        %v202 = vld [vmem:[%s142 + $0xd8] sm:$0xff]
        %v203 = vld [vmem:[%s142 + $0xe0] sm:$0xff]
        %v204 = vld [vmem:[%s142 + $0xe8] sm:$0xff]
        %v205 = vld [vmem:[%s142 + $0xf0] sm:$0xff]
        %v206 = vld [vmem:[%s142 + $0xf8] sm:$0xff]
        %v207 = vld [vmem:[%s142 + $0x100] sm:$0xff]
        %v208 = vld [vmem:[%s142 + $0x108] sm:$0xff]
        %v209 = vld [vmem:[%s142 + $0x110] sm:$0xff]
        %v210 = vld [vmem:[%s142 + $0x118] sm:$0xff]
        %v211 = vlaneseq
        %v212 = vand.u32 %v211, 127
        %v213 = vadd.s32 %v212, 128
        %v214 = vadd.s32 %v212, 256
        %v215 = vadd.s32 %v212, 384
        %v216 = vadd.s32 %v212, 512
        %v217 = vadd.s32 %v212, 640
        %v218 = vadd.s32 %v212, 768
        %v219 = vadd.s32 %v212, 896
        %v220 = vadd.s32 %v212, 1024
        %v221 = vadd.s32 %v212, 1152
        %v222 = vadd.s32 %v212, 1280
        %v223 = vadd.s32 %v212, 1408
        %v224 = vadd.s32 %v212, 1536
        %v225 = vadd.s32 %v212, 1664
        %v226 = vadd.s32 %v212, 1792
        %v227 = vadd.s32 %v212, 1920
        %v228 = vadd.s32 %v212, 2048
        %v229 = vadd.s32 %v212, 2176
        %vm230 = vcmp.lt.s32.totalorder %v212, 0
        %v231 = vsub.s32 0, %v212
        %v232 = vsel %vm230, %v231, %v212
        %v233 = vmul.u32.u64.compose %v232, 2863311531
        %v234 = vextract.low.u32 %v233
        %v235 = vextract.high.u32 %v233
        %v236 = vshrl.u32 %v235, 1
        %v237 = vmul.u32 %v236, 3
        %v238 = vsub.s32 %v232, %v237
        %v239 = vsub.s32 0, %v238
        %v240 = vsel %vm230, %v239, %v238
        %vm241 = vcmp.lt.s32.totalorder %v213, 0
        %v242 = vsub.s32 0, %v213
        %v243 = vsel %vm241, %v242, %v213
        %v244 = vmul.u32.u64.compose %v243, 2863311531
        %v245 = vextract.low.u32 %v244
        %v246 = vextract.high.u32 %v244
        %v247 = vshrl.u32 %v246, 1
        %v248 = vmul.u32 %v247, 3
        %v249 = vsub.s32 %v243, %v248
        %v250 = vsub.s32 0, %v249
        %v251 = vsel %vm241, %v250, %v249
        %vm252 = vcmp.lt.s32.totalorder %v214, 0
        %v253 = vsub.s32 0, %v214
        %v254 = vsel %vm252, %v253, %v214
        %v255 = vmul.u32.u64.compose %v254, 2863311531
        %v256 = vextract.low.u32 %v255
        %v257 = vextract.high.u32 %v255
        %v258 = vshrl.u32 %v257, 1
        %v259 = vmul.u32 %v258, 3
        %v260 = vsub.s32 %v254, %v259
        %v261 = vsub.s32 0, %v260
        %v262 = vsel %vm252, %v261, %v260
        %vm263 = vcmp.lt.s32.totalorder %v215, 0
        %v264 = vsub.s32 0, %v215
        %v265 = vsel %vm263, %v264, %v215
        %v266 = vmul.u32.u64.compose %v265, 2863311531
        %v267 = vextract.low.u32 %v266
        %v268 = vextract.high.u32 %v266
        %v269 = vshrl.u32 %v268, 1
        %v270 = vmul.u32 %v269, 3
        %v271 = vsub.s32 %v265, %v270
        %v272 = vsub.s32 0, %v271
        %v273 = vsel %vm263, %v272, %v271
        %vm274 = vcmp.lt.s32.totalorder %v216, 0
        %v275 = vsub.s32 0, %v216
        %v276 = vsel %vm274, %v275, %v216
        %v277 = vmul.u32.u64.compose %v276, 2863311531
        %v278 = vextract.low.u32 %v277
        %v279 = vextract.high.u32 %v277
        %v280 = vshrl.u32 %v279, 1
        %v281 = vmul.u32 %v280, 3
        %v282 = vsub.s32 %v276, %v281
        %v283 = vsub.s32 0, %v282
        %v284 = vsel %vm274, %v283, %v282
        %vm285 = vcmp.lt.s32.totalorder %v217, 0
        %v286 = vsub.s32 0, %v217
        %v287 = vsel %vm285, %v286, %v217
        %v288 = vmul.u32.u64.compose %v287, 2863311531
        %v289 = vextract.low.u32 %v288
        %v290 = vextract.high.u32 %v288
        %v291 = vshrl.u32 %v290, 1
        %v292 = vmul.u32 %v291, 3
        %v293 = vsub.s32 %v287, %v292
        %v294 = vsub.s32 0, %v293
        %v295 = vsel %vm285, %v294, %v293
        %vm296 = vcmp.lt.s32.totalorder %v218, 0
        %v297 = vsub.s32 0, %v218
        %v298 = vsel %vm296, %v297, %v218
        %v299 = vmul.u32.u64.compose %v298, 2863311531
        %v300 = vextract.low.u32 %v299
        %v301 = vextract.high.u32 %v299
        %v302 = vshrl.u32 %v301, 1
        %v303 = vmul.u32 %v302, 3
        %v304 = vsub.s32 %v298, %v303
        %v305 = vsub.s32 0, %v304
        %v306 = vsel %vm296, %v305, %v304
        %vm307 = vcmp.lt.s32.totalorder %v219, 0
        %v308 = vsub.s32 0, %v219
        %v309 = vsel %vm307, %v308, %v219
        %v310 = vmul.u32.u64.compose %v309, 2863311531
        %v311 = vextract.low.u32 %v310
        %v312 = vextract.high.u32 %v310
        %v313 = vshrl.u32 %v312, 1
        %v314 = vmul.u32 %v313, 3
        %v315 = vsub.s32 %v309, %v314
        %v316 = vsub.s32 0, %v315
        %v317 = vsel %vm307, %v316, %v315
        %vm318 = vcmp.lt.s32.totalorder %v220, 0
        %v319 = vsub.s32 0, %v220
        %v320 = vsel %vm318, %v319, %v220
        %v321 = vmul.u32.u64.compose %v320, 2863311531
        %v322 = vextract.low.u32 %v321
        %v323 = vextract.high.u32 %v321
        %v324 = vshrl.u32 %v323, 1
        %v325 = vmul.u32 %v324, 3
        %v326 = vsub.s32 %v320, %v325
        %v327 = vsub.s32 0, %v326
        %v328 = vsel %vm318, %v327, %v326
        %vm329 = vcmp.lt.s32.totalorder %v221, 0
        %v330 = vsub.s32 0, %v221
        %v331 = vsel %vm329, %v330, %v221
        %v332 = vmul.u32.u64.compose %v331, 2863311531
        %v333 = vextract.low.u32 %v332
        %v334 = vextract.high.u32 %v332
        %v335 = vshrl.u32 %v334, 1
        %v336 = vmul.u32 %v335, 3
        %v337 = vsub.s32 %v331, %v336
        %v338 = vsub.s32 0, %v337
        %v339 = vsel %vm329, %v338, %v337
        %vm340 = vcmp.lt.s32.totalorder %v222, 0
        %v341 = vsub.s32 0, %v222
        %v342 = vsel %vm340, %v341, %v222
        %v343 = vmul.u32.u64.compose %v342, 2863311531
        %v344 = vextract.low.u32 %v343
        %v345 = vextract.high.u32 %v343
        %v346 = vshrl.u32 %v345, 1
        %v347 = vmul.u32 %v346, 3
        %v348 = vsub.s32 %v342, %v347
        %v349 = vsub.s32 0, %v348
        %v350 = vsel %vm340, %v349, %v348
        %vm351 = vcmp.lt.s32.totalorder %v223, 0
        %v352 = vsub.s32 0, %v223
        %v353 = vsel %vm351, %v352, %v223
        %v354 = vmul.u32.u64.compose %v353, 2863311531
        %v355 = vextract.low.u32 %v354
        %v356 = vextract.high.u32 %v354
        %v357 = vshrl.u32 %v356, 1
        %v358 = vmul.u32 %v357, 3
        %v359 = vsub.s32 %v353, %v358
        %v360 = vsub.s32 0, %v359
        %v361 = vsel %vm351, %v360, %v359
        %vm362 = vcmp.lt.s32.totalorder %v224, 0
        %v363 = vsub.s32 0, %v224
        %v364 = vsel %vm362, %v363, %v224
        %v365 = vmul.u32.u64.compose %v364, 2863311531
        %v366 = vextract.low.u32 %v365
        %v367 = vextract.high.u32 %v365
        %v368 = vshrl.u32 %v367, 1
        %v369 = vmul.u32 %v368, 3
        %v370 = vsub.s32 %v364, %v369
        %v371 = vsub.s32 0, %v370
        %v372 = vsel %vm362, %v371, %v370
        %vm373 = vcmp.lt.s32.totalorder %v225, 0
        %v374 = vsub.s32 0, %v225
        %v375 = vsel %vm373, %v374, %v225
        %v376 = vmul.u32.u64.compose %v375, 2863311531
        %v377 = vextract.low.u32 %v376
        %v378 = vextract.high.u32 %v376
        %v379 = vshrl.u32 %v378, 1
        %v380 = vmul.u32 %v379, 3
        %v381 = vsub.s32 %v375, %v380
        %v382 = vsub.s32 0, %v381
        %v383 = vsel %vm373, %v382, %v381
        %vm384 = vcmp.lt.s32.totalorder %v226, 0
        %v385 = vsub.s32 0, %v226
        %v386 = vsel %vm384, %v385, %v226
        %v387 = vmul.u32.u64.compose %v386, 2863311531
        %v388 = vextract.low.u32 %v387
        %v389 = vextract.high.u32 %v387
        %v390 = vshrl.u32 %v389, 1
        %v391 = vmul.u32 %v390, 3
        %v392 = vsub.s32 %v386, %v391
        %v393 = vsub.s32 0, %v392
        %v394 = vsel %vm384, %v393, %v392
        %vm395 = vcmp.lt.s32.totalorder %v227, 0
        %v396 = vsub.s32 0, %v227
        %v397 = vsel %vm395, %v396, %v227
        %v398 = vmul.u32.u64.compose %v397, 2863311531
        %v399 = vextract.low.u32 %v398
        %v400 = vextract.high.u32 %v398
        %v401 = vshrl.u32 %v400, 1
        %v402 = vmul.u32 %v401, 3
        %v403 = vsub.s32 %v397, %v402
        %v404 = vsub.s32 0, %v403
        %v405 = vsel %vm395, %v404, %v403
        %vm406 = vcmp.lt.s32.totalorder %v228, 0
        %v407 = vsub.s32 0, %v228
        %v408 = vsel %vm406, %v407, %v228
        %v409 = vmul.u32.u64.compose %v408, 2863311531
        %v410 = vextract.low.u32 %v409
        %v411 = vextract.high.u32 %v409
        %v412 = vshrl.u32 %v411, 1
        %v413 = vmul.u32 %v412, 3
        %v414 = vsub.s32 %v408, %v413
        %v415 = vsub.s32 0, %v414
        %v416 = vsel %vm406, %v415, %v414
        %vm417 = vcmp.lt.s32.totalorder %v229, 0
        %v418 = vsub.s32 0, %v229
        %v419 = vsel %vm417, %v418, %v229
        %v420 = vmul.u32.u64.compose %v419, 2863311531
        %v421 = vextract.low.u32 %v420
        %v422 = vextract.high.u32 %v420
        %v423 = vshrl.u32 %v422, 1
        %v424 = vmul.u32 %v423, 3
        %v425 = vsub.s32 %v419, %v424
        %v426 = vsub.s32 0, %v425
        %v427 = vsel %vm417, %v426, %v425
        %vm428 = vcmp.ne.s32.totalorder %v240, 0
        %vm429 = vcmp.ne.s32.totalorder %v251, 0
        %vm430 = vcmp.ne.s32.totalorder %v262, 0
        %vm431 = vcmp.ne.s32.totalorder %v273, 0
        %vm432 = vcmp.ne.s32.totalorder %v284, 0
        %vm433 = vcmp.ne.s32.totalorder %v295, 0
        %vm434 = vcmp.ne.s32.totalorder %v306, 0
        %vm435 = vcmp.ne.s32.totalorder %v317, 0
        %vm436 = vcmp.ne.s32.totalorder %v328, 0
        %vm437 = vcmp.ne.s32.totalorder %v339, 0
        %vm438 = vcmp.ne.s32.totalorder %v350, 0
        %vm439 = vcmp.ne.s32.totalorder %v361, 0
        %vm440 = vcmp.ne.s32.totalorder %v372, 0
        %vm441 = vcmp.ne.s32.totalorder %v383, 0
        %vm442 = vcmp.ne.s32.totalorder %v394, 0
        %vm443 = vcmp.ne.s32.totalorder %v405, 0
        %vm444 = vcmp.ne.s32.totalorder %v416, 0
        %vm445 = vcmp.ne.s32.totalorder %v427, 0
        %vm446 = vcmp.lt.s32.totalorder %v240, 0
        %vm447 = vcmp.lt.s32.totalorder %v251, 0
        %vm448 = vcmp.lt.s32.totalorder %v262, 0
        %vm449 = vcmp.lt.s32.totalorder %v273, 0
        %vm450 = vcmp.lt.s32.totalorder %v284, 0
        %vm451 = vcmp.lt.s32.totalorder %v295, 0
        %vm452 = vcmp.lt.s32.totalorder %v306, 0
        %vm453 = vcmp.lt.s32.totalorder %v317, 0
        %vm454 = vcmp.lt.s32.totalorder %v328, 0
        %vm455 = vcmp.lt.s32.totalorder %v339, 0
        %vm456 = vcmp.lt.s32.totalorder %v350, 0
        %vm457 = vcmp.lt.s32.totalorder %v361, 0
        %vm458 = vcmp.lt.s32.totalorder %v372, 0
        %vm459 = vcmp.lt.s32.totalorder %v383, 0
        %vm460 = vcmp.lt.s32.totalorder %v394, 0
        %vm461 = vcmp.lt.s32.totalorder %v405, 0
        %vm462 = vcmp.lt.s32.totalorder %v416, 0
        %vm463 = vcmp.lt.s32.totalorder %v427, 0
        %vm464 = vmand %vm446, %vm428
        %vm465 = vmand %vm447, %vm429
        %vm466 = vmand %vm448, %vm430
        %vm467 = vmand %vm449, %vm431
        %vm468 = vmand %vm450, %vm432
        %vm469 = vmand %vm451, %vm433
        %vm470 = vmand %vm452, %vm434
        %vm471 = vmand %vm453, %vm435
        %vm472 = vmand %vm454, %vm436
        %vm473 = vmand %vm455, %vm437
        %vm474 = vmand %vm456, %vm438
        %vm475 = vmand %vm457, %vm439
        %vm476 = vmand %vm458, %vm440
        %vm477 = vmand %vm459, %vm441
        %vm478 = vmand %vm460, %vm442
        %vm479 = vmand %vm461, %vm443
        %vm480 = vmand %vm462, %vm444
        %vm481 = vmand %vm463, %vm445
        %v482 = vadd.s32 %v240, 3
        %v483 = vadd.s32 %v251, 3
        %v484 = vadd.s32 %v262, 3
        %v485 = vadd.s32 %v273, 3
        %v486 = vadd.s32 %v284, 3
        %v487 = vadd.s32 %v295, 3
        %v488 = vadd.s32 %v306, 3
        %v489 = vadd.s32 %v317, 3
        %v490 = vadd.s32 %v328, 3
        %v491 = vadd.s32 %v339, 3
        %v492 = vadd.s32 %v350, 3
        %v493 = vadd.s32 %v361, 3
        %v494 = vadd.s32 %v372, 3
        %v495 = vadd.s32 %v383, 3
        %v496 = vadd.s32 %v394, 3
        %v497 = vadd.s32 %v405, 3
        %v498 = vadd.s32 %v416, 3
        %v499 = vadd.s32 %v427, 3
        %v500 = vsel %vm464, %v482, %v240
        %v501 = vsel %vm465, %v483, %v251
        %v502 = vsel %vm466, %v484, %v262
        %v503 = vsel %vm467, %v485, %v273
        %v504 = vsel %vm468, %v486, %v284
        %v505 = vsel %vm469, %v487, %v295
        %v506 = vsel %vm470, %v488, %v306
        %v507 = vsel %vm471, %v489, %v317
        %v508 = vsel %vm472, %v490, %v328
        %v509 = vsel %vm473, %v491, %v339
        %v510 = vsel %vm474, %v492, %v350
        %v511 = vsel %vm475, %v493, %v361
        %v512 = vsel %vm476, %v494, %v372
        %v513 = vsel %vm477, %v495, %v383
        %v514 = vsel %vm478, %v496, %v394
        %v515 = vsel %vm479, %v497, %v405
        %v516 = vsel %vm480, %v498, %v416
        %v517 = vsel %vm481, %v499, %v427
        %vm518 = vcmp.eq.s32.totalorder %v500, 0
        %vm519 = vcmp.eq.s32.totalorder %v501, 0
        %vm520 = vcmp.eq.s32.totalorder %v502, 0
        %vm521 = vcmp.eq.s32.totalorder %v503, 0
        %vm522 = vcmp.eq.s32.totalorder %v504, 0
        %vm523 = vcmp.eq.s32.totalorder %v505, 0
        %vm524 = vcmp.eq.s32.totalorder %v506, 0
        %vm525 = vcmp.eq.s32.totalorder %v507, 0
        %vm526 = vcmp.eq.s32.totalorder %v508, 0
        %vm527 = vcmp.eq.s32.totalorder %v509, 0
        %vm528 = vcmp.eq.s32.totalorder %v510, 0
        %vm529 = vcmp.eq.s32.totalorder %v511, 0
        %vm530 = vcmp.eq.s32.totalorder %v512, 0
        %vm531 = vcmp.eq.s32.totalorder %v513, 0
        %vm532 = vcmp.eq.s32.totalorder %v514, 0
        %vm533 = vcmp.eq.s32.totalorder %v515, 0
        %vm534 = vcmp.eq.s32.totalorder %v516, 0
        %vm535 = vcmp.eq.s32.totalorder %v517, 0
        %vm536 = vcmp.eq.s32.totalorder %v500, 1
        %vm537 = vcmp.eq.s32.totalorder %v501, 1
        %vm538 = vcmp.eq.s32.totalorder %v502, 1
        %vm539 = vcmp.eq.s32.totalorder %v503, 1
        %vm540 = vcmp.eq.s32.totalorder %v504, 1
        %vm541 = vcmp.eq.s32.totalorder %v505, 1
        %vm542 = vcmp.eq.s32.totalorder %v506, 1
        %vm543 = vcmp.eq.s32.totalorder %v507, 1
        %vm544 = vcmp.eq.s32.totalorder %v508, 1
        %vm545 = vcmp.eq.s32.totalorder %v509, 1
        %vm546 = vcmp.eq.s32.totalorder %v510, 1
        %vm547 = vcmp.eq.s32.totalorder %v511, 1
        %vm548 = vcmp.eq.s32.totalorder %v512, 1
        %vm549 = vcmp.eq.s32.totalorder %v513, 1
        %vm550 = vcmp.eq.s32.totalorder %v514, 1
        %vm551 = vcmp.eq.s32.totalorder %v515, 1
        %vm552 = vcmp.eq.s32.totalorder %v516, 1
        %vm553 = vcmp.eq.s32.totalorder %v517, 1
        %v554 = vsel %vm536, 0.4, 0.3
        %v555 = vsel %vm537, 0.4, 0.3
        %v556 = vsel %vm538, 0.4, 0.3
        %v557 = vsel %vm539, 0.4, 0.3
        %v558 = vsel %vm540, 0.4, 0.3
        %v559 = vsel %vm541, 0.4, 0.3
        %v560 = vsel %vm542, 0.4, 0.3
        %v561 = vsel %vm543, 0.4, 0.3
        %v562 = vsel %vm544, 0.4, 0.3
        %v563 = vsel %vm545, 0.4, 0.3
        %v564 = vsel %vm546, 0.4, 0.3
        %v565 = vsel %vm547, 0.4, 0.3
        %v566 = vsel %vm548, 0.4, 0.3
        %v567 = vsel %vm549, 0.4, 0.3
        %v568 = vsel %vm550, 0.4, 0.3
        %v569 = vsel %vm551, 0.4, 0.3
        %v570 = vsel %vm552, 0.4, 0.3
        %v571 = vsel %vm553, 0.4, 0.3
        %v572 = vsel %vm518, 0.125, %v554
        %v573 = vsel %vm519, 0.125, %v555
        %v574 = vsel %vm520, 0.125, %v556
        %v575 = vsel %vm521, 0.125, %v557
        %v576 = vsel %vm522, 0.125, %v558
        %v577 = vsel %vm523, 0.125, %v559
        %v578 = vsel %vm524, 0.125, %v560
        %v579 = vsel %vm525, 0.125, %v561
        %v580 = vsel %vm526, 0.125, %v562
        %v581 = vsel %vm527, 0.125, %v563
        %v582 = vsel %vm528, 0.125, %v564
        %v583 = vsel %vm529, 0.125, %v565
        %v584 = vsel %vm530, 0.125, %v566
        %v585 = vsel %vm531, 0.125, %v567
        %v586 = vsel %vm532, 0.125, %v568
        %v587 = vsel %vm533, 0.125, %v569
        %v588 = vsel %vm534, 0.125, %v570
        %v589 = vsel %vm535, 0.125, %v571
        %v590 = vsel %vm536, 0.125, 0.4
        %v591 = vsel %vm537, 0.125, 0.4
        %v592 = vsel %vm538, 0.125, 0.4
        %v593 = vsel %vm539, 0.125, 0.4
        %v594 = vsel %vm540, 0.125, 0.4
        %v595 = vsel %vm541, 0.125, 0.4
        %v596 = vsel %vm542, 0.125, 0.4
        %v597 = vsel %vm543, 0.125, 0.4
        %v598 = vsel %vm544, 0.125, 0.4
        %v599 = vsel %vm545, 0.125, 0.4
        %v600 = vsel %vm546, 0.125, 0.4
        %v601 = vsel %vm547, 0.125, 0.4
        %v602 = vsel %vm548, 0.125, 0.4
        %v603 = vsel %vm549, 0.125, 0.4
        %v604 = vsel %vm550, 0.125, 0.4
        %v605 = vsel %vm551, 0.125, 0.4
        %v606 = vsel %vm552, 0.125, 0.4
        %v607 = vsel %vm553, 0.125, 0.4
        %v608 = vsel %vm518, 0.3, %v590
        %v609 = vsel %vm519, 0.3, %v591
        %v610 = vsel %vm520, 0.3, %v592
        %v611 = vsel %vm521, 0.3, %v593
        %v612 = vsel %vm522, 0.3, %v594
        %v613 = vsel %vm523, 0.3, %v595
        %v614 = vsel %vm524, 0.3, %v596
        %v615 = vsel %vm525, 0.3, %v597
        %v616 = vsel %vm526, 0.3, %v598
        %v617 = vsel %vm527, 0.3, %v599
        %v618 = vsel %vm528, 0.3, %v600
        %v619 = vsel %vm529, 0.3, %v601
        %v620 = vsel %vm530, 0.3, %v602
        %v621 = vsel %vm531, 0.3, %v603
        %v622 = vsel %vm532, 0.3, %v604
        %v623 = vsel %vm533, 0.3, %v605
        %v624 = vsel %vm534, 0.3, %v606
        %v625 = vsel %vm535, 0.3, %v607
        %v626 = vsel %vm518, 0.023, 0.0
        %v627 = vsel %vm519, 0.023, 0.0
        %v628 = vsel %vm520, 0.023, 0.0
        %v629 = vsel %vm521, 0.023, 0.0
        %v630 = vsel %vm522, 0.023, 0.0
        %v631 = vsel %vm523, 0.023, 0.0
        %v632 = vsel %vm524, 0.023, 0.0
        %v633 = vsel %vm525, 0.023, 0.0
        %v634 = vsel %vm526, 0.023, 0.0
        %v635 = vsel %vm527, 0.023, 0.0
        %v636 = vsel %vm528, 0.023, 0.0
        %v637 = vsel %vm529, 0.023, 0.0
        %v638 = vsel %vm530, 0.023, 0.0
        %v639 = vsel %vm531, 0.023, 0.0
        %v640 = vsel %vm532, 0.023, 0.0
        %v641 = vsel %vm533, 0.023, 0.0
        %v642 = vsel %vm534, 0.023, 0.0
        %v643 = vsel %vm535, 0.023, 0.0
        %v644 = vsel %vm536, 0.5, 0.2
        %v645 = vsel %vm537, 0.5, 0.2
        %v646 = vsel %vm538, 0.5, 0.2
        %v647 = vsel %vm539, 0.5, 0.2
        %v648 = vsel %vm540, 0.5, 0.2
        %v649 = vsel %vm541, 0.5, 0.2
        %v650 = vsel %vm542, 0.5, 0.2
        %v651 = vsel %vm543, 0.5, 0.2
        %v652 = vsel %vm544, 0.5, 0.2
        %v653 = vsel %vm545, 0.5, 0.2
        %v654 = vsel %vm546, 0.5, 0.2
        %v655 = vsel %vm547, 0.5, 0.2
        %v656 = vsel %vm548, 0.5, 0.2
        %v657 = vsel %vm549, 0.5, 0.2
        %v658 = vsel %vm550, 0.5, 0.2
        %v659 = vsel %vm551, 0.5, 0.2
        %v660 = vsel %vm552, 0.5, 0.2
        %v661 = vsel %vm553, 0.5, 0.2
        %v662 = vsel %vm518, 0.1, %v644
        %v663 = vsel %vm519, 0.1, %v645
        %v664 = vsel %vm520, 0.1, %v646
        %v665 = vsel %vm521, 0.1, %v647
        %v666 = vsel %vm522, 0.1, %v648
        %v667 = vsel %vm523, 0.1, %v649
        %v668 = vsel %vm524, 0.1, %v650
        %v669 = vsel %vm525, 0.1, %v651
        %v670 = vsel %vm526, 0.1, %v652
        %v671 = vsel %vm527, 0.1, %v653
        %v672 = vsel %vm528, 0.1, %v654
        %v673 = vsel %vm529, 0.1, %v655
        %v674 = vsel %vm530, 0.1, %v656
        %v675 = vsel %vm531, 0.1, %v657
        %v676 = vsel %vm532, 0.1, %v658
        %v677 = vsel %vm533, 0.1, %v659
        %v678 = vsel %vm534, 0.1, %v660
        %v679 = vsel %vm535, 0.1, %v661
        %v680 = vsel %vm518, 0.0, 1.0
        %v681 = vsel %vm519, 0.0, 1.0
        %v682 = vsel %vm520, 0.0, 1.0
        %v683 = vsel %vm521, 0.0, 1.0
        %v684 = vsel %vm522, 0.0, 1.0
        %v685 = vsel %vm523, 0.0, 1.0
        %v686 = vsel %vm524, 0.0, 1.0
        %v687 = vsel %vm525, 0.0, 1.0
        %v688 = vsel %vm526, 0.0, 1.0
        %v689 = vsel %vm527, 0.0, 1.0
        %v690 = vsel %vm528, 0.0, 1.0
        %v691 = vsel %vm529, 0.0, 1.0
        %v692 = vsel %vm530, 0.0, 1.0
        %v693 = vsel %vm531, 0.0, 1.0
        %v694 = vsel %vm532, 0.0, 1.0
        %v695 = vsel %vm533, 0.0, 1.0
        %v696 = vsel %vm534, 0.0, 1.0
        %v697 = vsel %vm535, 0.0, 1.0
        %v698 = vsel %vm536, 0.3, 1.0
        %v699 = vsel %vm537, 0.3, 1.0
        %v700 = vsel %vm538, 0.3, 1.0
        %v701 = vsel %vm539, 0.3, 1.0
        %v702 = vsel %vm540, 0.3, 1.0
        %v703 = vsel %vm541, 0.3, 1.0
        %v704 = vsel %vm542, 0.3, 1.0
        %v705 = vsel %vm543, 0.3, 1.0
        %v706 = vsel %vm544, 0.3, 1.0
        %v707 = vsel %vm545, 0.3, 1.0
        %v708 = vsel %vm546, 0.3, 1.0
        %v709 = vsel %vm547, 0.3, 1.0
        %v710 = vsel %vm548, 0.3, 1.0
        %v711 = vsel %vm549, 0.3, 1.0
        %v712 = vsel %vm550, 0.3, 1.0
        %v713 = vsel %vm551, 0.3, 1.0
        %v714 = vsel %vm552, 0.3, 1.0
        %v715 = vsel %vm553, 0.3, 1.0
        %v716 = vsel %vm518, 1.0, %v698
        %v717 = vsel %vm519, 1.0, %v699
        %v718 = vsel %vm520, 1.0, %v700
        %v719 = vsel %vm521, 1.0, %v701
        %v720 = vsel %vm522, 1.0, %v702
        %v721 = vsel %vm523, 1.0, %v703
        %v722 = vsel %vm524, 1.0, %v704
        %v723 = vsel %vm525, 1.0, %v705
        %v724 = vsel %vm526, 1.0, %v706
        %v725 = vsel %vm527, 1.0, %v707
        %v726 = vsel %vm528, 1.0, %v708
        %v727 = vsel %vm529, 1.0, %v709
        %v728 = vsel %vm530, 1.0, %v710
        %v729 = vsel %vm531, 1.0, %v711
        %v730 = vsel %vm532, 1.0, %v712
        %v731 = vsel %vm533, 1.0, %v713
        %v732 = vsel %vm534, 1.0, %v714
        %v733 = vsel %vm535, 1.0, %v715
        %v734 = vsel %vm536, 1.0, 0.0
        %v735 = vsel %vm537, 1.0, 0.0
        %v736 = vsel %vm538, 1.0, 0.0
        %v737 = vsel %vm539, 1.0, 0.0
        %v738 = vsel %vm540, 1.0, 0.0
        %v739 = vsel %vm541, 1.0, 0.0
        %v740 = vsel %vm542, 1.0, 0.0
        %v741 = vsel %vm543, 1.0, 0.0
        %v742 = vsel %vm544, 1.0, 0.0
        %v743 = vsel %vm545, 1.0, 0.0
        %v744 = vsel %vm546, 1.0, 0.0
        %v745 = vsel %vm547, 1.0, 0.0
        %v746 = vsel %vm548, 1.0, 0.0
        %v747 = vsel %vm549, 1.0, 0.0
        %v748 = vsel %vm550, 1.0, 0.0
        %v749 = vsel %vm551, 1.0, 0.0
        %v750 = vsel %vm552, 1.0, 0.0
        %v751 = vsel %vm553, 1.0, 0.0
        %v752 = vsel %vm518, 0.0, %v734
        %v753 = vsel %vm519, 0.0, %v735
        %v754 = vsel %vm520, 0.0, %v736
        %v755 = vsel %vm521, 0.0, %v737
        %v756 = vsel %vm522, 0.0, %v738
        %v757 = vsel %vm523, 0.0, %v739
        %v758 = vsel %vm524, 0.0, %v740
        %v759 = vsel %vm525, 0.0, %v741
        %v760 = vsel %vm526, 0.0, %v742
        %v761 = vsel %vm527, 0.0, %v743
        %v762 = vsel %vm528, 0.0, %v744
        %v763 = vsel %vm529, 0.0, %v745
        %v764 = vsel %vm530, 0.0, %v746
        %v765 = vsel %vm531, 0.0, %v747
        %v766 = vsel %vm532, 0.0, %v748
        %v767 = vsel %vm533, 0.0, %v749
        %v768 = vsel %vm534, 0.0, %v750
        %v769 = vsel %vm535, 0.0, %v751
        %v770 = vsel %vm518, 0.02, 1.1
        %v771 = vsel %vm519, 0.02, 1.1
        %v772 = vsel %vm520, 0.02, 1.1
        %v773 = vsel %vm521, 0.02, 1.1
        %v774 = vsel %vm522, 0.02, 1.1
        %v775 = vsel %vm523, 0.02, 1.1
        %v776 = vsel %vm524, 0.02, 1.1
        %v777 = vsel %vm525, 0.02, 1.1
        %v778 = vsel %vm526, 0.02, 1.1
        %v779 = vsel %vm527, 0.02, 1.1
        %v780 = vsel %vm528, 0.02, 1.1
        %v781 = vsel %vm529, 0.02, 1.1
        %v782 = vsel %vm530, 0.02, 1.1
        %v783 = vsel %vm531, 0.02, 1.1
        %v784 = vsel %vm532, 0.02, 1.1
        %v785 = vsel %vm533, 0.02, 1.1
        %v786 = vsel %vm534, 0.02, 1.1
        %v787 = vsel %vm535, 0.02, 1.1
        %v788 = vsel %vm518, 1.0, -1.0
        %v789 = vsel %vm519, 1.0, -1.0
        %v790 = vsel %vm520, 1.0, -1.0
        %v791 = vsel %vm521, 1.0, -1.0
        %v792 = vsel %vm522, 1.0, -1.0
        %v793 = vsel %vm523, 1.0, -1.0
        %v794 = vsel %vm524, 1.0, -1.0
        %v795 = vsel %vm525, 1.0, -1.0
        %v796 = vsel %vm526, 1.0, -1.0
        %v797 = vsel %vm527, 1.0, -1.0
        %v798 = vsel %vm528, 1.0, -1.0
        %v799 = vsel %vm529, 1.0, -1.0
        %v800 = vsel %vm530, 1.0, -1.0
        %v801 = vsel %vm531, 1.0, -1.0
        %v802 = vsel %vm532, 1.0, -1.0
        %v803 = vsel %vm533, 1.0, -1.0
        %v804 = vsel %vm534, 1.0, -1.0
        %v805 = vsel %vm535, 1.0, -1.0
        %v806 = vsel %vm536, 0.167, 0.1
        %v807 = vsel %vm537, 0.167, 0.1
        %v808 = vsel %vm538, 0.167, 0.1
        %v809 = vsel %vm539, 0.167, 0.1
        %v810 = vsel %vm540, 0.167, 0.1
        %v811 = vsel %vm541, 0.167, 0.1
        %v812 = vsel %vm542, 0.167, 0.1
        %v813 = vsel %vm543, 0.167, 0.1
        %v814 = vsel %vm544, 0.167, 0.1
        %v815 = vsel %vm545, 0.167, 0.1
        %v816 = vsel %vm546, 0.167, 0.1
        %v817 = vsel %vm547, 0.167, 0.1
        %v818 = vsel %vm548, 0.167, 0.1
        %v819 = vsel %vm549, 0.167, 0.1
        %v820 = vsel %vm550, 0.167, 0.1
        %v821 = vsel %vm551, 0.167, 0.1
        %v822 = vsel %vm552, 0.167, 0.1
        %v823 = vsel %vm553, 0.167, 0.1
        %v824 = vsel %vm518, 0.0033, %v806
        %v825 = vsel %vm519, 0.0033, %v807
        %v826 = vsel %vm520, 0.0033, %v808
        %v827 = vsel %vm521, 0.0033, %v809
        %v828 = vsel %vm522, 0.0033, %v810
        %v829 = vsel %vm523, 0.0033, %v811
        %v830 = vsel %vm524, 0.0033, %v812
        %v831 = vsel %vm525, 0.0033, %v813
        %v832 = vsel %vm526, 0.0033, %v814
        %v833 = vsel %vm527, 0.0033, %v815
        %v834 = vsel %vm528, 0.0033, %v816
        %v835 = vsel %vm529, 0.0033, %v817
        %v836 = vsel %vm530, 0.0033, %v818
        %v837 = vsel %vm531, 0.0033, %v819
        %v838 = vsel %vm532, 0.0033, %v820
        %v839 = vsel %vm533, 0.0033, %v821
        %v840 = vsel %vm534, 0.0033, %v822
        %v841 = vsel %vm535, 0.0033, %v823
        %v842 = vsel %vm518, 1.0, 0.1
        %v843 = vsel %vm519, 1.0, 0.1
        %v844 = vsel %vm520, 1.0, 0.1
        %v845 = vsel %vm521, 1.0, 0.1
        %v846 = vsel %vm522, 1.0, 0.1
        %v847 = vsel %vm523, 1.0, 0.1
        %v848 = vsel %vm524, 1.0, 0.1
        %v849 = vsel %vm525, 1.0, 0.1
        %v850 = vsel %vm526, 1.0, 0.1
        %v851 = vsel %vm527, 1.0, 0.1
        %v852 = vsel %vm528, 1.0, 0.1
        %v853 = vsel %vm529, 1.0, 0.1
        %v854 = vsel %vm530, 1.0, 0.1
        %v855 = vsel %vm531, 1.0, 0.1
        %v856 = vsel %vm532, 1.0, 0.1
        %v857 = vsel %vm533, 1.0, 0.1
        %v858 = vsel %vm534, 1.0, 0.1
        %v859 = vsel %vm535, 1.0, 0.1
        %860 = vrot.lane.b32.xlu0 %v175, 1
        %v861 = vpop.permute.xlu0 %860
        %862 = vrot.lane.b32.xlu0 %v193, 1
        %v863 = vpop.permute.xlu0 %862
        %864 = vrot.lane.b32.xlu0 %v176, 1
        %v865 = vpop.permute.xlu0 %864
        %866 = vrot.lane.b32.xlu0 %v194, 1
        %v867 = vpop.permute.xlu0 %866
        %868 = vrot.lane.b32.xlu0 %v177, 1
        %v869 = vpop.permute.xlu0 %868
        %870 = vrot.lane.b32.xlu0 %v195, 1
        %v871 = vpop.permute.xlu0 %870
        %872 = vrot.lane.b32.xlu0 %v178, 1
        %v873 = vpop.permute.xlu0 %872
        %874 = vrot.lane.b32.xlu0 %v196, 1
        %v875 = vpop.permute.xlu0 %874
        %876 = vrot.lane.b32.xlu0 %v179, 1
        %v877 = vpop.permute.xlu0 %876
        %878 = vrot.lane.b32.xlu0 %v197, 1
        %v879 = vpop.permute.xlu0 %878
        %880 = vrot.lane.b32.xlu0 %v180, 1
        %v881 = vpop.permute.xlu0 %880
        %882 = vrot.lane.b32.xlu0 %v198, 1
        %v883 = vpop.permute.xlu0 %882
        %884 = vrot.lane.b32.xlu0 %v181, 1
        %v885 = vpop.permute.xlu0 %884
        %886 = vrot.lane.b32.xlu0 %v199, 1
        %v887 = vpop.permute.xlu0 %886
        %888 = vrot.lane.b32.xlu0 %v182, 1
        %v889 = vpop.permute.xlu0 %888
        %890 = vrot.lane.b32.xlu0 %v200, 1
        %v891 = vpop.permute.xlu0 %890
        %892 = vrot.lane.b32.xlu0 %v183, 1
        %v893 = vpop.permute.xlu0 %892
        %894 = vrot.lane.b32.xlu0 %v201, 1
        %v895 = vpop.permute.xlu0 %894
        %896 = vrot.lane.b32.xlu0 %v184, 1
        %v897 = vpop.permute.xlu0 %896
        %898 = vrot.lane.b32.xlu0 %v202, 1
        %v899 = vpop.permute.xlu0 %898
        %900 = vrot.lane.b32.xlu0 %v185, 1
        %v901 = vpop.permute.xlu0 %900
        %902 = vrot.lane.b32.xlu0 %v203, 1
        %v903 = vpop.permute.xlu0 %902
        %904 = vrot.lane.b32.xlu0 %v186, 1
        %v905 = vpop.permute.xlu0 %904
        %906 = vrot.lane.b32.xlu0 %v204, 1
        %v907 = vpop.permute.xlu0 %906
        %908 = vrot.lane.b32.xlu0 %v187, 1
        %v909 = vpop.permute.xlu0 %908
        %910 = vrot.lane.b32.xlu0 %v205, 1
        %v911 = vpop.permute.xlu0 %910
        %912 = vrot.lane.b32.xlu0 %v188, 1
        %v913 = vpop.permute.xlu0 %912
        %914 = vrot.lane.b32.xlu0 %v206, 1
        %v915 = vpop.permute.xlu0 %914
        %916 = vrot.lane.b32.xlu0 %v189, 1
        %v917 = vpop.permute.xlu0 %916
        %918 = vrot.lane.b32.xlu0 %v207, 1
        %v919 = vpop.permute.xlu0 %918
        %920 = vrot.lane.b32.xlu0 %v190, 1
        %v921 = vpop.permute.xlu0 %920
        %922 = vrot.lane.b32.xlu0 %v208, 1
        %v923 = vpop.permute.xlu0 %922
        %924 = vrot.lane.b32.xlu0 %v191, 1
        %v925 = vpop.permute.xlu0 %924
        %926 = vrot.lane.b32.xlu0 %v209, 1
        %v927 = vpop.permute.xlu0 %926
        %928 = vrot.lane.b32.xlu0 %v192, 1
        %v929 = vpop.permute.xlu0 %928
        %930 = vrot.lane.b32.xlu0 %v210, 1
        %v931 = vpop.permute.xlu0 %930
        %vm932 = vcmp.lt.s32.totalorder %v212, 1
        %v933 = vsel %vm932, %v925, %v929
        %v934 = vsel %vm932, %v927, %v931
        %v935 = vsel %vm932, %v921, %v925
        %v936 = vsel %vm932, %v923, %v927
        %v937 = vsel %vm932, %v917, %v921
        %v938 = vsel %vm932, %v919, %v923
        %v939 = vsel %vm932, %v913, %v917
        %v940 = vsel %vm932, %v915, %v919
        %v941 = vsel %vm932, %v909, %v913
        %v942 = vsel %vm932, %v911, %v915
        %v943 = vsel %vm932, %v905, %v909
        %v944 = vsel %vm932, %v907, %v911
        %v945 = vsel %vm932, %v901, %v905
        %v946 = vsel %vm932, %v903, %v907
        %v947 = vsel %vm932, %v897, %v901
        %v948 = vsel %vm932, %v899, %v903
        %v949 = vsel %vm932, %v893, %v897
        %v950 = vsel %vm932, %v895, %v899
        %v951 = vsel %vm932, %v889, %v893
        %v952 = vsel %vm932, %v891, %v895
        %v953 = vsel %vm932, %v885, %v889
        %v954 = vsel %vm932, %v887, %v891
        %v955 = vsel %vm932, %v881, %v885
        %v956 = vsel %vm932, %v883, %v887
        %v957 = vsel %vm932, %v877, %v881
        %v958 = vsel %vm932, %v879, %v883
        %v959 = vsel %vm932, %v873, %v877
        %v960 = vsel %vm932, %v875, %v879
        %v961 = vsel %vm932, %v869, %v873
        %v962 = vsel %vm932, %v871, %v875
        %v963 = vsel %vm932, %v865, %v869
        %v964 = vsel %vm932, %v867, %v871
        %v965 = vsel %vm932, %v861, %v865
        %v966 = vsel %vm932, %v863, %v867
        %v967 = vsel %vm932, %v929, %v861
        %v968 = vsel %vm932, %v931, %v863
        %969 = vrot.lane.b32.xlu0 %v175, 126
        %v970 = vpop.permute.xlu0 %969
        %971 = vrot.lane.b32.xlu0 %v193, 126
        %v972 = vpop.permute.xlu0 %971
        %973 = vrot.lane.b32.xlu0 %v176, 126
        %v974 = vpop.permute.xlu0 %973
        %975 = vrot.lane.b32.xlu0 %v194, 126
        %v976 = vpop.permute.xlu0 %975
        %977 = vrot.lane.b32.xlu0 %v177, 126
        %v978 = vpop.permute.xlu0 %977
        %979 = vrot.lane.b32.xlu0 %v195, 126
        %v980 = vpop.permute.xlu0 %979
        %981 = vrot.lane.b32.xlu0 %v178, 126
        %v982 = vpop.permute.xlu0 %981
        %983 = vrot.lane.b32.xlu0 %v196, 126
        %v984 = vpop.permute.xlu0 %983
        %985 = vrot.lane.b32.xlu0 %v179, 126
        %v986 = vpop.permute.xlu0 %985
        %987 = vrot.lane.b32.xlu0 %v197, 126
        %v988 = vpop.permute.xlu0 %987
        %989 = vrot.lane.b32.xlu0 %v180, 126
        %v990 = vpop.permute.xlu0 %989
        %991 = vrot.lane.b32.xlu0 %v198, 126
        %v992 = vpop.permute.xlu0 %991
        %993 = vrot.lane.b32.xlu0 %v181, 126
        %v994 = vpop.permute.xlu0 %993
        %995 = vrot.lane.b32.xlu0 %v199, 126
        %v996 = vpop.permute.xlu0 %995
        %997 = vrot.lane.b32.xlu0 %v182, 126
        %v998 = vpop.permute.xlu0 %997
        %999 = vrot.lane.b32.xlu0 %v200, 126
        %v1000 = vpop.permute.xlu0 %999
        %1001 = vrot.lane.b32.xlu0 %v183, 126
        %v1002 = vpop.permute.xlu0 %1001
        %1003 = vrot.lane.b32.xlu0 %v201, 126
        %v1004 = vpop.permute.xlu0 %1003
        %1005 = vrot.lane.b32.xlu0 %v184, 126
        %v1006 = vpop.permute.xlu0 %1005
        %1007 = vrot.lane.b32.xlu0 %v202, 126
        %v1008 = vpop.permute.xlu0 %1007
        %1009 = vrot.lane.b32.xlu0 %v185, 126
        %v1010 = vpop.permute.xlu0 %1009
        %1011 = vrot.lane.b32.xlu0 %v203, 126
        %v1012 = vpop.permute.xlu0 %1011
        %1013 = vrot.lane.b32.xlu0 %v186, 126
        %v1014 = vpop.permute.xlu0 %1013
        %1015 = vrot.lane.b32.xlu0 %v204, 126
        %v1016 = vpop.permute.xlu0 %1015
        %1017 = vrot.lane.b32.xlu0 %v187, 126
        %v1018 = vpop.permute.xlu0 %1017
        %1019 = vrot.lane.b32.xlu0 %v205, 126
        %v1020 = vpop.permute.xlu0 %1019
        %1021 = vrot.lane.b32.xlu0 %v188, 126
        %v1022 = vpop.permute.xlu0 %1021
        %1023 = vrot.lane.b32.xlu0 %v206, 126
        %v1024 = vpop.permute.xlu0 %1023
        %1025 = vrot.lane.b32.xlu0 %v189, 126
        %v1026 = vpop.permute.xlu0 %1025
        %1027 = vrot.lane.b32.xlu0 %v207, 126
        %v1028 = vpop.permute.xlu0 %1027
        %1029 = vrot.lane.b32.xlu0 %v190, 126
        %v1030 = vpop.permute.xlu0 %1029
        %1031 = vrot.lane.b32.xlu0 %v208, 126
        %v1032 = vpop.permute.xlu0 %1031
        %1033 = vrot.lane.b32.xlu0 %v191, 126
        %v1034 = vpop.permute.xlu0 %1033
        %1035 = vrot.lane.b32.xlu0 %v209, 126
        %v1036 = vpop.permute.xlu0 %1035
        %1037 = vrot.lane.b32.xlu0 %v192, 126
        %v1038 = vpop.permute.xlu0 %1037
        %1039 = vrot.lane.b32.xlu0 %v210, 126
        %v1040 = vpop.permute.xlu0 %1039
        %vm1041 = vcmp.lt.s32.totalorder %v212, 126
        %v1042 = vsel %vm1041, %v1034, %v1038
        %v1043 = vsel %vm1041, %v1036, %v1040
        %v1044 = vsel %vm1041, %v1030, %v1034
        %v1045 = vsel %vm1041, %v1032, %v1036
        %v1046 = vsel %vm1041, %v1026, %v1030
        %v1047 = vsel %vm1041, %v1028, %v1032
        %v1048 = vsel %vm1041, %v1022, %v1026
        %v1049 = vsel %vm1041, %v1024, %v1028
        %v1050 = vsel %vm1041, %v1018, %v1022
        %v1051 = vsel %vm1041, %v1020, %v1024
        %v1052 = vsel %vm1041, %v1014, %v1018
        %v1053 = vsel %vm1041, %v1016, %v1020
        %v1054 = vsel %vm1041, %v1010, %v1014
        %v1055 = vsel %vm1041, %v1012, %v1016
        %v1056 = vsel %vm1041, %v1006, %v1010
        %v1057 = vsel %vm1041, %v1008, %v1012
        %v1058 = vsel %vm1041, %v1002, %v1006
        %v1059 = vsel %vm1041, %v1004, %v1008
        %v1060 = vsel %vm1041, %v998, %v1002
        %v1061 = vsel %vm1041, %v1000, %v1004
        %v1062 = vsel %vm1041, %v994, %v998
        %v1063 = vsel %vm1041, %v996, %v1000
        %v1064 = vsel %vm1041, %v990, %v994
        %v1065 = vsel %vm1041, %v992, %v996
        %v1066 = vsel %vm1041, %v986, %v990
        %v1067 = vsel %vm1041, %v988, %v992
        %v1068 = vsel %vm1041, %v982, %v986
        %v1069 = vsel %vm1041, %v984, %v988
        %v1070 = vsel %vm1041, %v978, %v982
        %v1071 = vsel %vm1041, %v980, %v984
        %v1072 = vsel %vm1041, %v974, %v978
        %v1073 = vsel %vm1041, %v976, %v980
        %v1074 = vsel %vm1041, %v970, %v974
        %v1075 = vsel %vm1041, %v972, %v976
        %v1076 = vsel %vm1041, %v1038, %v970
        %v1077 = vsel %vm1041, %v1040, %v972
        %v1078 = vsel %vm518, 1, 0
        %v1079 = vsel %vm519, 1, 0
        %v1080 = vsel %vm520, 1, 0
        %v1081 = vsel %vm521, 1, 0
        %v1082 = vsel %vm522, 1, 0
        %v1083 = vsel %vm523, 1, 0
        %v1084 = vsel %vm524, 1, 0
        %v1085 = vsel %vm525, 1, 0
        %v1086 = vsel %vm526, 1, 0
        %v1087 = vsel %vm527, 1, 0
        %v1088 = vsel %vm528, 1, 0
        %v1089 = vsel %vm529, 1, 0
        %v1090 = vsel %vm530, 1, 0
        %v1091 = vsel %vm531, 1, 0
        %v1092 = vsel %vm532, 1, 0
        %v1093 = vsel %vm533, 1, 0
        %v1094 = vsel %vm534, 1, 0
        %v1095 = vsel %vm535, 1, 0
        %vm1096 = vcmp.eq.s32.totalorder %v1078, 1
        %vm1097 = vcmp.eq.s32.totalorder %v1079, 1
        %vm1098 = vcmp.eq.s32.totalorder %v1080, 1
        %vm1099 = vcmp.eq.s32.totalorder %v1081, 1
        %vm1100 = vcmp.eq.s32.totalorder %v1082, 1
        %vm1101 = vcmp.eq.s32.totalorder %v1083, 1
        %vm1102 = vcmp.eq.s32.totalorder %v1084, 1
        %vm1103 = vcmp.eq.s32.totalorder %v1085, 1
        %vm1104 = vcmp.eq.s32.totalorder %v1086, 1
        %vm1105 = vcmp.eq.s32.totalorder %v1087, 1
        %vm1106 = vcmp.eq.s32.totalorder %v1088, 1
        %vm1107 = vcmp.eq.s32.totalorder %v1089, 1
        %vm1108 = vcmp.eq.s32.totalorder %v1090, 1
        %vm1109 = vcmp.eq.s32.totalorder %v1091, 1
        %vm1110 = vcmp.eq.s32.totalorder %v1092, 1
        %vm1111 = vcmp.eq.s32.totalorder %v1093, 1
        %vm1112 = vcmp.eq.s32.totalorder %v1094, 1
        %vm1113 = vcmp.eq.s32.totalorder %v1095, 1
        %v1114 = vsel %vm1096, %v1074, %v967
        %v1115 = vsel %vm1097, %v1072, %v965
        %v1116 = vsel %vm1098, %v1070, %v963
        %v1117 = vsel %vm1099, %v1068, %v961
        %v1118 = vsel %vm1100, %v1066, %v959
        %v1119 = vsel %vm1101, %v1064, %v957
        %v1120 = vsel %vm1102, %v1062, %v955
        %v1121 = vsel %vm1103, %v1060, %v953
        %v1122 = vsel %vm1104, %v1058, %v951
        %v1123 = vsel %vm1105, %v1056, %v949
        %v1124 = vsel %vm1106, %v1054, %v947
        %v1125 = vsel %vm1107, %v1052, %v945
        %v1126 = vsel %vm1108, %v1050, %v943
        %v1127 = vsel %vm1109, %v1048, %v941
        %v1128 = vsel %vm1110, %v1046, %v939
        %v1129 = vsel %vm1111, %v1044, %v937
        %v1130 = vsel %vm1112, %v1042, %v935
        %v1131 = vsel %vm1113, %v1076, %v933
        %v1132 = vsel %vm1096, %v1075, %v968
        %v1133 = vsel %vm1097, %v1073, %v966
        %v1134 = vsel %vm1098, %v1071, %v964
        %v1135 = vsel %vm1099, %v1069, %v962
        %v1136 = vsel %vm1100, %v1067, %v960
        %v1137 = vsel %vm1101, %v1065, %v958
        %v1138 = vsel %vm1102, %v1063, %v956
        %v1139 = vsel %vm1103, %v1061, %v954
        %v1140 = vsel %vm1104, %v1059, %v952
        %v1141 = vsel %vm1105, %v1057, %v950
        %v1142 = vsel %vm1106, %v1055, %v948
        %v1143 = vsel %vm1107, %v1053, %v946
        %v1144 = vsel %vm1108, %v1051, %v944
        %v1145 = vsel %vm1109, %v1049, %v942
        %v1146 = vsel %vm1110, %v1047, %v940
        %v1147 = vsel %vm1111, %v1045, %v938
        %v1148 = vsel %vm1112, %v1043, %v936
        %v1149 = vsel %vm1113, %v1077, %v934
        %v1150 = vmul.f32 %v175, 0.2
        %v1151 = vmul.f32 %v176, 0.2
        %v1152 = vmul.f32 %v177, 0.2
        %v1153 = vmul.f32 %v178, 0.2
        %v1154 = vmul.f32 %v179, 0.2
        %v1155 = vmul.f32 %v180, 0.2
        %v1156 = vmul.f32 %v181, 0.2
        %v1157 = vmul.f32 %v182, 0.2
        %v1158 = vmul.f32 %v183, 0.2
        %v1159 = vmul.f32 %v184, 0.2
        %v1160 = vmul.f32 %v185, 0.2
        %v1161 = vmul.f32 %v186, 0.2
        %v1162 = vmul.f32 %v187, 0.2
        %v1163 = vmul.f32 %v188, 0.2
        %v1164 = vmul.f32 %v189, 0.2
        %v1165 = vmul.f32 %v190, 0.2
        %v1166 = vmul.f32 %v191, 0.2
        %v1167 = vmul.f32 %v192, 0.2
        %v1168 = vmul.f32 %v193, 0.2
        %v1169 = vmul.f32 %v194, 0.2
        %v1170 = vmul.f32 %v195, 0.2
        %v1171 = vmul.f32 %v196, 0.2
        %v1172 = vmul.f32 %v197, 0.2
        %v1173 = vmul.f32 %v198, 0.2
        %v1174 = vmul.f32 %v199, 0.2
        %v1175 = vmul.f32 %v200, 0.2
        %v1176 = vmul.f32 %v201, 0.2
        %v1177 = vmul.f32 %v202, 0.2
        %v1178 = vmul.f32 %v203, 0.2
        %v1179 = vmul.f32 %v204, 0.2
        %v1180 = vmul.f32 %v205, 0.2
        %v1181 = vmul.f32 %v206, 0.2
        %v1182 = vmul.f32 %v207, 0.2
        %v1183 = vmul.f32 %v208, 0.2
        %v1184 = vmul.f32 %v209, 0.2
        %v1185 = vmul.f32 %v210, 0.2
        %v1186 = vadd.f32 %v1150, %v572
        %v1187 = vadd.f32 %v1151, %v573
        %v1188 = vadd.f32 %v1152, %v574
        %v1189 = vadd.f32 %v1153, %v575
        %v1190 = vadd.f32 %v1154, %v576
        %v1191 = vadd.f32 %v1155, %v577
        %v1192 = vadd.f32 %v1156, %v578
        %v1193 = vadd.f32 %v1157, %v579
        %v1194 = vadd.f32 %v1158, %v580
        %v1195 = vadd.f32 %v1159, %v581
        %v1196 = vadd.f32 %v1160, %v582
        %v1197 = vadd.f32 %v1161, %v583
        %v1198 = vadd.f32 %v1162, %v584
        %v1199 = vadd.f32 %v1163, %v585
        %v1200 = vadd.f32 %v1164, %v586
        %v1201 = vadd.f32 %v1165, %v587
        %v1202 = vadd.f32 %v1166, %v588
        %v1203 = vadd.f32 %v1167, %v589
        %v1204 = vadd.f32 %v1168, %v572
        %v1205 = vadd.f32 %v1169, %v573
        %v1206 = vadd.f32 %v1170, %v574
        %v1207 = vadd.f32 %v1171, %v575
        %v1208 = vadd.f32 %v1172, %v576
        %v1209 = vadd.f32 %v1173, %v577
        %v1210 = vadd.f32 %v1174, %v578
        %v1211 = vadd.f32 %v1175, %v579
        %v1212 = vadd.f32 %v1176, %v580
        %v1213 = vadd.f32 %v1177, %v581
        %v1214 = vadd.f32 %v1178, %v582
        %v1215 = vadd.f32 %v1179, %v583
        %v1216 = vadd.f32 %v1180, %v584
        %v1217 = vadd.f32 %v1181, %v585
        %v1218 = vadd.f32 %v1182, %v586
        %v1219 = vadd.f32 %v1183, %v587
        %v1220 = vadd.f32 %v1184, %v588
        %v1221 = vadd.f32 %v1185, %v589
        %v1222 = vmul.f32 %v1114, 0.2
        %v1223 = vmul.f32 %v1115, 0.2
        %v1224 = vmul.f32 %v1116, 0.2
        %v1225 = vmul.f32 %v1117, 0.2
        %v1226 = vmul.f32 %v1118, 0.2
        %v1227 = vmul.f32 %v1119, 0.2
        %v1228 = vmul.f32 %v1120, 0.2
        %v1229 = vmul.f32 %v1121, 0.2
        %v1230 = vmul.f32 %v1122, 0.2
        %v1231 = vmul.f32 %v1123, 0.2
        %v1232 = vmul.f32 %v1124, 0.2
        %v1233 = vmul.f32 %v1125, 0.2
        %v1234 = vmul.f32 %v1126, 0.2
        %v1235 = vmul.f32 %v1127, 0.2
        %v1236 = vmul.f32 %v1128, 0.2
        %v1237 = vmul.f32 %v1129, 0.2
        %v1238 = vmul.f32 %v1130, 0.2
        %v1239 = vmul.f32 %v1131, 0.2
        %v1240 = vmul.f32 %v1132, 0.2
        %v1241 = vmul.f32 %v1133, 0.2
        %v1242 = vmul.f32 %v1134, 0.2
        %v1243 = vmul.f32 %v1135, 0.2
        %v1244 = vmul.f32 %v1136, 0.2
        %v1245 = vmul.f32 %v1137, 0.2
        %v1246 = vmul.f32 %v1138, 0.2
        %v1247 = vmul.f32 %v1139, 0.2
        %v1248 = vmul.f32 %v1140, 0.2
        %v1249 = vmul.f32 %v1141, 0.2
        %v1250 = vmul.f32 %v1142, 0.2
        %v1251 = vmul.f32 %v1143, 0.2
        %v1252 = vmul.f32 %v1144, 0.2
        %v1253 = vmul.f32 %v1145, 0.2
        %v1254 = vmul.f32 %v1146, 0.2
        %v1255 = vmul.f32 %v1147, 0.2
        %v1256 = vmul.f32 %v1148, 0.2
        %v1257 = vmul.f32 %v1149, 0.2
        %v1258 = vadd.f32 %v1222, %v608
        %v1259 = vadd.f32 %v1223, %v609
        %v1260 = vadd.f32 %v1224, %v610
        %v1261 = vadd.f32 %v1225, %v611
        %v1262 = vadd.f32 %v1226, %v612
        %v1263 = vadd.f32 %v1227, %v613
        %v1264 = vadd.f32 %v1228, %v614
        %v1265 = vadd.f32 %v1229, %v615
        %v1266 = vadd.f32 %v1230, %v616
        %v1267 = vadd.f32 %v1231, %v617
        %v1268 = vadd.f32 %v1232, %v618
        %v1269 = vadd.f32 %v1233, %v619
        %v1270 = vadd.f32 %v1234, %v620
        %v1271 = vadd.f32 %v1235, %v621
        %v1272 = vadd.f32 %v1236, %v622
        %v1273 = vadd.f32 %v1237, %v623
        %v1274 = vadd.f32 %v1238, %v624
        %v1275 = vadd.f32 %v1239, %v625
        %v1276 = vadd.f32 %v1240, %v608
        %v1277 = vadd.f32 %v1241, %v609
        %v1278 = vadd.f32 %v1242, %v610
        %v1279 = vadd.f32 %v1243, %v611
        %v1280 = vadd.f32 %v1244, %v612
        %v1281 = vadd.f32 %v1245, %v613
        %v1282 = vadd.f32 %v1246, %v614
        %v1283 = vadd.f32 %v1247, %v615
        %v1284 = vadd.f32 %v1248, %v616
        %v1285 = vadd.f32 %v1249, %v617
        %v1286 = vadd.f32 %v1250, %v618
        %v1287 = vadd.f32 %v1251, %v619
        %v1288 = vadd.f32 %v1252, %v620
        %v1289 = vadd.f32 %v1253, %v621
        %v1290 = vadd.f32 %v1254, %v622
        %v1291 = vadd.f32 %v1255, %v623
        %v1292 = vadd.f32 %v1256, %v624
        %v1293 = vadd.f32 %v1257, %v625
        %v1294 = vmul.f32 %v662, %v1258
        %v1295 = vmul.f32 %v663, %v1259
        %v1296 = vmul.f32 %v664, %v1260
        %v1297 = vmul.f32 %v665, %v1261
        %v1298 = vmul.f32 %v666, %v1262
        %v1299 = vmul.f32 %v667, %v1263
        %v1300 = vmul.f32 %v668, %v1264
        %v1301 = vmul.f32 %v669, %v1265
        %v1302 = vmul.f32 %v670, %v1266
        %v1303 = vmul.f32 %v671, %v1267
        %v1304 = vmul.f32 %v672, %v1268
        %v1305 = vmul.f32 %v673, %v1269
        %v1306 = vmul.f32 %v674, %v1270
        %v1307 = vmul.f32 %v675, %v1271
        %v1308 = vmul.f32 %v676, %v1272
        %v1309 = vmul.f32 %v677, %v1273
        %v1310 = vmul.f32 %v678, %v1274
        %v1311 = vmul.f32 %v679, %v1275
        %v1312 = vmul.f32 %v662, %v1276
        %v1313 = vmul.f32 %v663, %v1277
        %v1314 = vmul.f32 %v664, %v1278
        %v1315 = vmul.f32 %v665, %v1279
        %v1316 = vmul.f32 %v666, %v1280
        %v1317 = vmul.f32 %v667, %v1281
        %v1318 = vmul.f32 %v668, %v1282
        %v1319 = vmul.f32 %v669, %v1283
        %v1320 = vmul.f32 %v670, %v1284
        %v1321 = vmul.f32 %v671, %v1285
        %v1322 = vmul.f32 %v672, %v1286
        %v1323 = vmul.f32 %v673, %v1287
        %v1324 = vmul.f32 %v674, %v1288
        %v1325 = vmul.f32 %v675, %v1289
        %v1326 = vmul.f32 %v676, %v1290
        %v1327 = vmul.f32 %v677, %v1291
        %v1328 = vmul.f32 %v678, %v1292
        %v1329 = vmul.f32 %v679, %v1293
        %v1330 = vsub.f32 %v680, %v1186
        %v1331 = vsub.f32 %v681, %v1187
        %v1332 = vsub.f32 %v682, %v1188
        %v1333 = vsub.f32 %v683, %v1189
        %v1334 = vsub.f32 %v684, %v1190
        %v1335 = vsub.f32 %v685, %v1191
        %v1336 = vsub.f32 %v686, %v1192
        %v1337 = vsub.f32 %v687, %v1193
        %v1338 = vsub.f32 %v688, %v1194
        %v1339 = vsub.f32 %v689, %v1195
        %v1340 = vsub.f32 %v690, %v1196
        %v1341 = vsub.f32 %v691, %v1197
        %v1342 = vsub.f32 %v692, %v1198
        %v1343 = vsub.f32 %v693, %v1199
        %v1344 = vsub.f32 %v694, %v1200
        %v1345 = vsub.f32 %v695, %v1201
        %v1346 = vsub.f32 %v696, %v1202
        %v1347 = vsub.f32 %v697, %v1203
        %v1348 = vsub.f32 %v680, %v1204
        %v1349 = vsub.f32 %v681, %v1205
        %v1350 = vsub.f32 %v682, %v1206
        %v1351 = vsub.f32 %v683, %v1207
        %v1352 = vsub.f32 %v684, %v1208
        %v1353 = vsub.f32 %v685, %v1209
        %v1354 = vsub.f32 %v686, %v1210
        %v1355 = vsub.f32 %v687, %v1211
        %v1356 = vsub.f32 %v688, %v1212
        %v1357 = vsub.f32 %v689, %v1213
        %v1358 = vsub.f32 %v690, %v1214
        %v1359 = vsub.f32 %v691, %v1215
        %v1360 = vsub.f32 %v692, %v1216
        %v1361 = vsub.f32 %v693, %v1217
        %v1362 = vsub.f32 %v694, %v1218
        %v1363 = vsub.f32 %v695, %v1219
        %v1364 = vsub.f32 %v696, %v1220
        %v1365 = vsub.f32 %v697, %v1221
        %v1366 = vmul.f32 %v1294, %v1330
        %v1367 = vmul.f32 %v1295, %v1331
        %v1368 = vmul.f32 %v1296, %v1332
        %v1369 = vmul.f32 %v1297, %v1333
        %v1370 = vmul.f32 %v1298, %v1334
        %v1371 = vmul.f32 %v1299, %v1335
        %v1372 = vmul.f32 %v1300, %v1336
        %v1373 = vmul.f32 %v1301, %v1337
        %v1374 = vmul.f32 %v1302, %v1338
        %v1375 = vmul.f32 %v1303, %v1339
        %v1376 = vmul.f32 %v1304, %v1340
        %v1377 = vmul.f32 %v1305, %v1341
        %v1378 = vmul.f32 %v1306, %v1342
        %v1379 = vmul.f32 %v1307, %v1343
        %v1380 = vmul.f32 %v1308, %v1344
        %v1381 = vmul.f32 %v1309, %v1345
        %v1382 = vmul.f32 %v1310, %v1346
        %v1383 = vmul.f32 %v1311, %v1347
        %v1384 = vmul.f32 %v1312, %v1348
        %v1385 = vmul.f32 %v1313, %v1349
        %v1386 = vmul.f32 %v1314, %v1350
        %v1387 = vmul.f32 %v1315, %v1351
        %v1388 = vmul.f32 %v1316, %v1352
        %v1389 = vmul.f32 %v1317, %v1353
        %v1390 = vmul.f32 %v1318, %v1354
        %v1391 = vmul.f32 %v1319, %v1355
        %v1392 = vmul.f32 %v1320, %v1356
        %v1393 = vmul.f32 %v1321, %v1357
        %v1394 = vmul.f32 %v1322, %v1358
        %v1395 = vmul.f32 %v1323, %v1359
        %v1396 = vmul.f32 %v1324, %v1360
        %v1397 = vmul.f32 %v1325, %v1361
        %v1398 = vmul.f32 %v1326, %v1362
        %v1399 = vmul.f32 %v1327, %v1363
        %v1400 = vmul.f32 %v1328, %v1364
        %v1401 = vmul.f32 %v1329, %v1365
        %v1402 = vmul.f32 %v752, %v1258
        %v1403 = vmul.f32 %v753, %v1259
        %v1404 = vmul.f32 %v754, %v1260
        %v1405 = vmul.f32 %v755, %v1261
        %v1406 = vmul.f32 %v756, %v1262
        %v1407 = vmul.f32 %v757, %v1263
        %v1408 = vmul.f32 %v758, %v1264
        %v1409 = vmul.f32 %v759, %v1265
        %v1410 = vmul.f32 %v760, %v1266
        %v1411 = vmul.f32 %v761, %v1267
        %v1412 = vmul.f32 %v762, %v1268
        %v1413 = vmul.f32 %v763, %v1269
        %v1414 = vmul.f32 %v764, %v1270
        %v1415 = vmul.f32 %v765, %v1271
        %v1416 = vmul.f32 %v766, %v1272
        %v1417 = vmul.f32 %v767, %v1273
        %v1418 = vmul.f32 %v768, %v1274
        %v1419 = vmul.f32 %v769, %v1275
        %v1420 = vmul.f32 %v752, %v1276
        %v1421 = vmul.f32 %v753, %v1277
        %v1422 = vmul.f32 %v754, %v1278
        %v1423 = vmul.f32 %v755, %v1279
        %v1424 = vmul.f32 %v756, %v1280
        %v1425 = vmul.f32 %v757, %v1281
        %v1426 = vmul.f32 %v758, %v1282
        %v1427 = vmul.f32 %v759, %v1283
        %v1428 = vmul.f32 %v760, %v1284
        %v1429 = vmul.f32 %v761, %v1285
        %v1430 = vmul.f32 %v762, %v1286
        %v1431 = vmul.f32 %v763, %v1287
        %v1432 = vmul.f32 %v764, %v1288
        %v1433 = vmul.f32 %v765, %v1289
        %v1434 = vmul.f32 %v766, %v1290
        %v1435 = vmul.f32 %v767, %v1291
        %v1436 = vmul.f32 %v768, %v1292
        %v1437 = vmul.f32 %v769, %v1293
        %v1438 = vadd.f32 %v716, %v1402
        %v1439 = vadd.f32 %v717, %v1403
        %v1440 = vadd.f32 %v718, %v1404
        %v1441 = vadd.f32 %v719, %v1405
        %v1442 = vadd.f32 %v720, %v1406
        %v1443 = vadd.f32 %v721, %v1407
        %v1444 = vadd.f32 %v722, %v1408
        %v1445 = vadd.f32 %v723, %v1409
        %v1446 = vadd.f32 %v724, %v1410
        %v1447 = vadd.f32 %v725, %v1411
        %v1448 = vadd.f32 %v726, %v1412
        %v1449 = vadd.f32 %v727, %v1413
        %v1450 = vadd.f32 %v728, %v1414
        %v1451 = vadd.f32 %v729, %v1415
        %v1452 = vadd.f32 %v730, %v1416
        %v1453 = vadd.f32 %v731, %v1417
        %v1454 = vadd.f32 %v732, %v1418
        %v1455 = vadd.f32 %v733, %v1419
        %v1456 = vadd.f32 %v716, %v1420
        %v1457 = vadd.f32 %v717, %v1421
        %v1458 = vadd.f32 %v718, %v1422
        %v1459 = vadd.f32 %v719, %v1423
        %v1460 = vadd.f32 %v720, %v1424
        %v1461 = vadd.f32 %v721, %v1425
        %v1462 = vadd.f32 %v722, %v1426
        %v1463 = vadd.f32 %v723, %v1427
        %v1464 = vadd.f32 %v724, %v1428
        %v1465 = vadd.f32 %v725, %v1429
        %v1466 = vadd.f32 %v726, %v1430
        %v1467 = vadd.f32 %v727, %v1431
        %v1468 = vadd.f32 %v728, %v1432
        %v1469 = vadd.f32 %v729, %v1433
        %v1470 = vadd.f32 %v730, %v1434
        %v1471 = vadd.f32 %v731, %v1435
        %v1472 = vadd.f32 %v732, %v1436
        %v1473 = vadd.f32 %v733, %v1437
        %v1474 = vmul.f32 %v788, %v1186
        %v1475 = vmul.f32 %v789, %v1187
        %v1476 = vmul.f32 %v790, %v1188
        %v1477 = vmul.f32 %v791, %v1189
        %v1478 = vmul.f32 %v792, %v1190
        %v1479 = vmul.f32 %v793, %v1191
        %v1480 = vmul.f32 %v794, %v1192
        %v1481 = vmul.f32 %v795, %v1193
        %v1482 = vmul.f32 %v796, %v1194
        %v1483 = vmul.f32 %v797, %v1195
        %v1484 = vmul.f32 %v798, %v1196
        %v1485 = vmul.f32 %v799, %v1197
        %v1486 = vmul.f32 %v800, %v1198
        %v1487 = vmul.f32 %v801, %v1199
        %v1488 = vmul.f32 %v802, %v1200
        %v1489 = vmul.f32 %v803, %v1201
        %v1490 = vmul.f32 %v804, %v1202
        %v1491 = vmul.f32 %v805, %v1203
        %v1492 = vmul.f32 %v788, %v1204
        %v1493 = vmul.f32 %v789, %v1205
        %v1494 = vmul.f32 %v790, %v1206
        %v1495 = vmul.f32 %v791, %v1207
        %v1496 = vmul.f32 %v792, %v1208
        %v1497 = vmul.f32 %v793, %v1209
        %v1498 = vmul.f32 %v794, %v1210
        %v1499 = vmul.f32 %v795, %v1211
        %v1500 = vmul.f32 %v796, %v1212
        %v1501 = vmul.f32 %v797, %v1213
        %v1502 = vmul.f32 %v798, %v1214
        %v1503 = vmul.f32 %v799, %v1215
        %v1504 = vmul.f32 %v800, %v1216
        %v1505 = vmul.f32 %v801, %v1217
        %v1506 = vmul.f32 %v802, %v1218
        %v1507 = vmul.f32 %v803, %v1219
        %v1508 = vmul.f32 %v804, %v1220
        %v1509 = vmul.f32 %v805, %v1221
        %v1510 = vadd.f32 %v770, %v1474
        %v1511 = vadd.f32 %v771, %v1475
        %v1512 = vadd.f32 %v772, %v1476
        %v1513 = vadd.f32 %v773, %v1477
        %v1514 = vadd.f32 %v774, %v1478
        %v1515 = vadd.f32 %v775, %v1479
        %v1516 = vadd.f32 %v776, %v1480
        %v1517 = vadd.f32 %v777, %v1481
        %v1518 = vadd.f32 %v778, %v1482
        %v1519 = vadd.f32 %v779, %v1483
        %v1520 = vadd.f32 %v780, %v1484
        %v1521 = vadd.f32 %v781, %v1485
        %v1522 = vadd.f32 %v782, %v1486
        %v1523 = vadd.f32 %v783, %v1487
        %v1524 = vadd.f32 %v784, %v1488
        %v1525 = vadd.f32 %v785, %v1489
        %v1526 = vadd.f32 %v786, %v1490
        %v1527 = vadd.f32 %v787, %v1491
        %v1528 = vadd.f32 %v770, %v1492
        %v1529 = vadd.f32 %v771, %v1493
        %v1530 = vadd.f32 %v772, %v1494
        %v1531 = vadd.f32 %v773, %v1495
        %v1532 = vadd.f32 %v774, %v1496
        %v1533 = vadd.f32 %v775, %v1497
        %v1534 = vadd.f32 %v776, %v1498
        %v1535 = vadd.f32 %v777, %v1499
        %v1536 = vadd.f32 %v778, %v1500
        %v1537 = vadd.f32 %v779, %v1501
        %v1538 = vadd.f32 %v780, %v1502
        %v1539 = vadd.f32 %v781, %v1503
        %v1540 = vadd.f32 %v782, %v1504
        %v1541 = vadd.f32 %v783, %v1505
        %v1542 = vadd.f32 %v784, %v1506
        %v1543 = vadd.f32 %v785, %v1507
        %v1544 = vadd.f32 %v786, %v1508
        %v1545 = vadd.f32 %v787, %v1509
        %v1546 = vmul.f32 %v1438, %v1510
        %v1547 = vmul.f32 %v1439, %v1511
        %v1548 = vmul.f32 %v1440, %v1512
        %v1549 = vmul.f32 %v1441, %v1513
        %v1550 = vmul.f32 %v1442, %v1514
        %v1551 = vmul.f32 %v1443, %v1515
        %v1552 = vmul.f32 %v1444, %v1516
        %v1553 = vmul.f32 %v1445, %v1517
        %v1554 = vmul.f32 %v1446, %v1518
        %v1555 = vmul.f32 %v1447, %v1519
        %v1556 = vmul.f32 %v1448, %v1520
        %v1557 = vmul.f32 %v1449, %v1521
        %v1558 = vmul.f32 %v1450, %v1522
        %v1559 = vmul.f32 %v1451, %v1523
        %v1560 = vmul.f32 %v1452, %v1524
        %v1561 = vmul.f32 %v1453, %v1525
        %v1562 = vmul.f32 %v1454, %v1526
        %v1563 = vmul.f32 %v1455, %v1527
        %v1564 = vmul.f32 %v1456, %v1528
        %v1565 = vmul.f32 %v1457, %v1529
        %v1566 = vmul.f32 %v1458, %v1530
        %v1567 = vmul.f32 %v1459, %v1531
        %v1568 = vmul.f32 %v1460, %v1532
        %v1569 = vmul.f32 %v1461, %v1533
        %v1570 = vmul.f32 %v1462, %v1534
        %v1571 = vmul.f32 %v1463, %v1535
        %v1572 = vmul.f32 %v1464, %v1536
        %v1573 = vmul.f32 %v1465, %v1537
        %v1574 = vmul.f32 %v1466, %v1538
        %v1575 = vmul.f32 %v1467, %v1539
        %v1576 = vmul.f32 %v1468, %v1540
        %v1577 = vmul.f32 %v1469, %v1541
        %v1578 = vmul.f32 %v1470, %v1542
        %v1579 = vmul.f32 %v1471, %v1543
        %v1580 = vmul.f32 %v1472, %v1544
        %v1581 = vmul.f32 %v1473, %v1545
        %v1582 = vmul.f32 %v824, %v1186
        %v1583 = vmul.f32 %v825, %v1187
        %v1584 = vmul.f32 %v826, %v1188
        %v1585 = vmul.f32 %v827, %v1189
        %v1586 = vmul.f32 %v828, %v1190
        %v1587 = vmul.f32 %v829, %v1191
        %v1588 = vmul.f32 %v830, %v1192
        %v1589 = vmul.f32 %v831, %v1193
        %v1590 = vmul.f32 %v832, %v1194
        %v1591 = vmul.f32 %v833, %v1195
        %v1592 = vmul.f32 %v834, %v1196
        %v1593 = vmul.f32 %v835, %v1197
        %v1594 = vmul.f32 %v836, %v1198
        %v1595 = vmul.f32 %v837, %v1199
        %v1596 = vmul.f32 %v838, %v1200
        %v1597 = vmul.f32 %v839, %v1201
        %v1598 = vmul.f32 %v840, %v1202
        %v1599 = vmul.f32 %v841, %v1203
        %v1600 = vmul.f32 %v824, %v1204
        %v1601 = vmul.f32 %v825, %v1205
        %v1602 = vmul.f32 %v826, %v1206
        %v1603 = vmul.f32 %v827, %v1207
        %v1604 = vmul.f32 %v828, %v1208
        %v1605 = vmul.f32 %v829, %v1209
        %v1606 = vmul.f32 %v830, %v1210
        %v1607 = vmul.f32 %v831, %v1211
        %v1608 = vmul.f32 %v832, %v1212
        %v1609 = vmul.f32 %v833, %v1213
        %v1610 = vmul.f32 %v834, %v1214
        %v1611 = vmul.f32 %v835, %v1215
        %v1612 = vmul.f32 %v836, %v1216
        %v1613 = vmul.f32 %v837, %v1217
        %v1614 = vmul.f32 %v838, %v1218
        %v1615 = vmul.f32 %v839, %v1219
        %v1616 = vmul.f32 %v840, %v1220
        %v1617 = vmul.f32 %v841, %v1221
        %v1618 = vmul.f32 %v680, %v1186
        %v1619 = vmul.f32 %v681, %v1187
        %v1620 = vmul.f32 %v682, %v1188
        %v1621 = vmul.f32 %v683, %v1189
        %v1622 = vmul.f32 %v684, %v1190
        %v1623 = vmul.f32 %v685, %v1191
        %v1624 = vmul.f32 %v686, %v1192
        %v1625 = vmul.f32 %v687, %v1193
        %v1626 = vmul.f32 %v688, %v1194
        %v1627 = vmul.f32 %v689, %v1195
        %v1628 = vmul.f32 %v690, %v1196
        %v1629 = vmul.f32 %v691, %v1197
        %v1630 = vmul.f32 %v692, %v1198
        %v1631 = vmul.f32 %v693, %v1199
        %v1632 = vmul.f32 %v694, %v1200
        %v1633 = vmul.f32 %v695, %v1201
        %v1634 = vmul.f32 %v696, %v1202
        %v1635 = vmul.f32 %v697, %v1203
        %v1636 = vmul.f32 %v680, %v1204
        %v1637 = vmul.f32 %v681, %v1205
        %v1638 = vmul.f32 %v682, %v1206
        %v1639 = vmul.f32 %v683, %v1207
        %v1640 = vmul.f32 %v684, %v1208
        %v1641 = vmul.f32 %v685, %v1209
        %v1642 = vmul.f32 %v686, %v1210
        %v1643 = vmul.f32 %v687, %v1211
        %v1644 = vmul.f32 %v688, %v1212
        %v1645 = vmul.f32 %v689, %v1213
        %v1646 = vmul.f32 %v690, %v1214
        %v1647 = vmul.f32 %v691, %v1215
        %v1648 = vmul.f32 %v692, %v1216
        %v1649 = vmul.f32 %v693, %v1217
        %v1650 = vmul.f32 %v694, %v1218
        %v1651 = vmul.f32 %v695, %v1219
        %v1652 = vmul.f32 %v696, %v1220
        %v1653 = vmul.f32 %v697, %v1221
        %v1654 = vadd.f32 %v842, %v1618
        %v1655 = vadd.f32 %v843, %v1619
        %v1656 = vadd.f32 %v844, %v1620
        %v1657 = vadd.f32 %v845, %v1621
        %v1658 = vadd.f32 %v846, %v1622
        %v1659 = vadd.f32 %v847, %v1623
        %v1660 = vadd.f32 %v848, %v1624
        %v1661 = vadd.f32 %v849, %v1625
        %v1662 = vadd.f32 %v850, %v1626
        %v1663 = vadd.f32 %v851, %v1627
        %v1664 = vadd.f32 %v852, %v1628
        %v1665 = vadd.f32 %v853, %v1629
        %v1666 = vadd.f32 %v854, %v1630
        %v1667 = vadd.f32 %v855, %v1631
        %v1668 = vadd.f32 %v856, %v1632
        %v1669 = vadd.f32 %v857, %v1633
        %v1670 = vadd.f32 %v858, %v1634
        %v1671 = vadd.f32 %v859, %v1635
        %v1672 = vadd.f32 %v842, %v1636
        %v1673 = vadd.f32 %v843, %v1637
        %v1674 = vadd.f32 %v844, %v1638
        %v1675 = vadd.f32 %v845, %v1639
        %v1676 = vadd.f32 %v846, %v1640
        %v1677 = vadd.f32 %v847, %v1641
        %v1678 = vadd.f32 %v848, %v1642
        %v1679 = vadd.f32 %v849, %v1643
        %v1680 = vadd.f32 %v850, %v1644
        %v1681 = vadd.f32 %v851, %v1645
        %v1682 = vadd.f32 %v852, %v1646
        %v1683 = vadd.f32 %v853, %v1647
        %v1684 = vadd.f32 %v854, %v1648
        %v1685 = vadd.f32 %v855, %v1649
        %v1686 = vadd.f32 %v856, %v1650
        %v1687 = vadd.f32 %v857, %v1651
        %v1688 = vadd.f32 %v858, %v1652
        %v1689 = vadd.f32 %v859, %v1653
        %v1690 = vmul.f32 %v1366, %v1654
        %v1691 = vmul.f32 %v1367, %v1655
        %v1692 = vmul.f32 %v1368, %v1656
        %v1693 = vmul.f32 %v1369, %v1657
        %v1694 = vmul.f32 %v1370, %v1658
        %v1695 = vmul.f32 %v1371, %v1659
        %v1696 = vmul.f32 %v1372, %v1660
        %v1697 = vmul.f32 %v1373, %v1661
        %v1698 = vmul.f32 %v1374, %v1662
        %v1699 = vmul.f32 %v1375, %v1663
        %v1700 = vmul.f32 %v1376, %v1664
        %v1701 = vmul.f32 %v1377, %v1665
        %v1702 = vmul.f32 %v1378, %v1666
        %v1703 = vmul.f32 %v1379, %v1667
        %v1704 = vmul.f32 %v1380, %v1668
        %v1705 = vmul.f32 %v1381, %v1669
        %v1706 = vmul.f32 %v1382, %v1670
        %v1707 = vmul.f32 %v1383, %v1671
        %v1708 = vmul.f32 %v1384, %v1672
        %v1709 = vmul.f32 %v1385, %v1673
        %v1710 = vmul.f32 %v1386, %v1674
        %v1711 = vmul.f32 %v1387, %v1675
        %v1712 = vmul.f32 %v1388, %v1676
        %v1713 = vmul.f32 %v1389, %v1677
        %v1714 = vmul.f32 %v1390, %v1678
        %v1715 = vmul.f32 %v1391, %v1679
        %v1716 = vmul.f32 %v1392, %v1680
        %v1717 = vmul.f32 %v1393, %v1681
        %v1718 = vmul.f32 %v1394, %v1682
        %v1719 = vmul.f32 %v1395, %v1683
        %v1720 = vmul.f32 %v1396, %v1684
        %v1721 = vmul.f32 %v1397, %v1685
        %v1722 = vmul.f32 %v1398, %v1686
        %v1723 = vmul.f32 %v1399, %v1687
        %v1724 = vmul.f32 %v1400, %v1688
        %v1725 = vmul.f32 %v1401, %v1689
        %v1726 = vmul.f32 %v1582, %v1546
        %v1727 = vmul.f32 %v1583, %v1547
        %v1728 = vmul.f32 %v1584, %v1548
        %v1729 = vmul.f32 %v1585, %v1549
        %v1730 = vmul.f32 %v1586, %v1550
        %v1731 = vmul.f32 %v1587, %v1551
        %v1732 = vmul.f32 %v1588, %v1552
        %v1733 = vmul.f32 %v1589, %v1553
        %v1734 = vmul.f32 %v1590, %v1554
        %v1735 = vmul.f32 %v1591, %v1555
        %v1736 = vmul.f32 %v1592, %v1556
        %v1737 = vmul.f32 %v1593, %v1557
        %v1738 = vmul.f32 %v1594, %v1558
        %v1739 = vmul.f32 %v1595, %v1559
        %v1740 = vmul.f32 %v1596, %v1560
        %v1741 = vmul.f32 %v1597, %v1561
        %v1742 = vmul.f32 %v1598, %v1562
        %v1743 = vmul.f32 %v1599, %v1563
        %v1744 = vmul.f32 %v1600, %v1564
        %v1745 = vmul.f32 %v1601, %v1565
        %v1746 = vmul.f32 %v1602, %v1566
        %v1747 = vmul.f32 %v1603, %v1567
        %v1748 = vmul.f32 %v1604, %v1568
        %v1749 = vmul.f32 %v1605, %v1569
        %v1750 = vmul.f32 %v1606, %v1570
        %v1751 = vmul.f32 %v1607, %v1571
        %v1752 = vmul.f32 %v1608, %v1572
        %v1753 = vmul.f32 %v1609, %v1573
        %v1754 = vmul.f32 %v1610, %v1574
        %v1755 = vmul.f32 %v1611, %v1575
        %v1756 = vmul.f32 %v1612, %v1576
        %v1757 = vmul.f32 %v1613, %v1577
        %v1758 = vmul.f32 %v1614, %v1578
        %v1759 = vmul.f32 %v1615, %v1579
        %v1760 = vmul.f32 %v1616, %v1580
        %v1761 = vmul.f32 %v1617, %v1581
        %v1762 = vsub.f32 %v1690, %v1726
        %v1763 = vsub.f32 %v1691, %v1727
        %v1764 = vsub.f32 %v1692, %v1728
        %v1765 = vsub.f32 %v1693, %v1729
        %v1766 = vsub.f32 %v1694, %v1730
        %v1767 = vsub.f32 %v1695, %v1731
        %v1768 = vsub.f32 %v1696, %v1732
        %v1769 = vsub.f32 %v1697, %v1733
        %v1770 = vsub.f32 %v1698, %v1734
        %v1771 = vsub.f32 %v1699, %v1735
        %v1772 = vsub.f32 %v1700, %v1736
        %v1773 = vsub.f32 %v1701, %v1737
        %v1774 = vsub.f32 %v1702, %v1738
        %v1775 = vsub.f32 %v1703, %v1739
        %v1776 = vsub.f32 %v1704, %v1740
        %v1777 = vsub.f32 %v1705, %v1741
        %v1778 = vsub.f32 %v1706, %v1742
        %v1779 = vsub.f32 %v1707, %v1743
        %v1780 = vsub.f32 %v1708, %v1744
        %v1781 = vsub.f32 %v1709, %v1745
        %v1782 = vsub.f32 %v1710, %v1746
        %v1783 = vsub.f32 %v1711, %v1747
        %v1784 = vsub.f32 %v1712, %v1748
        %v1785 = vsub.f32 %v1713, %v1749
        %v1786 = vsub.f32 %v1714, %v1750
        %v1787 = vsub.f32 %v1715, %v1751
        %v1788 = vsub.f32 %v1716, %v1752
        %v1789 = vsub.f32 %v1717, %v1753
        %v1790 = vsub.f32 %v1718, %v1754
        %v1791 = vsub.f32 %v1719, %v1755
        %v1792 = vsub.f32 %v1720, %v1756
        %v1793 = vsub.f32 %v1721, %v1757
        %v1794 = vsub.f32 %v1722, %v1758
        %v1795 = vsub.f32 %v1723, %v1759
        %v1796 = vsub.f32 %v1724, %v1760
        %v1797 = vsub.f32 %v1725, %v1761
        %v1798 = vmul.f32 %v1546, %v1654
        %v1799 = vmul.f32 %v1547, %v1655
        %v1800 = vmul.f32 %v1548, %v1656
        %v1801 = vmul.f32 %v1549, %v1657
        %v1802 = vmul.f32 %v1550, %v1658
        %v1803 = vmul.f32 %v1551, %v1659
        %v1804 = vmul.f32 %v1552, %v1660
        %v1805 = vmul.f32 %v1553, %v1661
        %v1806 = vmul.f32 %v1554, %v1662
        %v1807 = vmul.f32 %v1555, %v1663
        %v1808 = vmul.f32 %v1556, %v1664
        %v1809 = vmul.f32 %v1557, %v1665
        %v1810 = vmul.f32 %v1558, %v1666
        %v1811 = vmul.f32 %v1559, %v1667
        %v1812 = vmul.f32 %v1560, %v1668
        %v1813 = vmul.f32 %v1561, %v1669
        %v1814 = vmul.f32 %v1562, %v1670
        %v1815 = vmul.f32 %v1563, %v1671
        %v1816 = vmul.f32 %v1564, %v1672
        %v1817 = vmul.f32 %v1565, %v1673
        %v1818 = vmul.f32 %v1566, %v1674
        %v1819 = vmul.f32 %v1567, %v1675
        %v1820 = vmul.f32 %v1568, %v1676
        %v1821 = vmul.f32 %v1569, %v1677
        %v1822 = vmul.f32 %v1570, %v1678
        %v1823 = vmul.f32 %v1571, %v1679
        %v1824 = vmul.f32 %v1572, %v1680
        %v1825 = vmul.f32 %v1573, %v1681
        %v1826 = vmul.f32 %v1574, %v1682
        %v1827 = vmul.f32 %v1575, %v1683
        %v1828 = vmul.f32 %v1576, %v1684
        %v1829 = vmul.f32 %v1577, %v1685
        %v1830 = vmul.f32 %v1578, %v1686
        %v1831 = vmul.f32 %v1579, %v1687
        %v1832 = vmul.f32 %v1580, %v1688
        %v1833 = vmul.f32 %v1581, %v1689
        %v1834 = vrcp.pop %v1798
        %v1835 = vmul.f32 %v1762, %v1834
        %v1836 = vrcp.pop %v1799
        %v1837 = vmul.f32 %v1763, %v1836
        %v1838 = vrcp.pop %v1800
        %v1839 = vmul.f32 %v1764, %v1838
        %v1840 = vrcp.pop %v1801
        %v1841 = vmul.f32 %v1765, %v1840
        %v1842 = vrcp.pop %v1802
        %v1843 = vmul.f32 %v1766, %v1842
        %v1844 = vrcp.pop %v1803
        %v1845 = vmul.f32 %v1767, %v1844
        %v1846 = vrcp.pop %v1804
        %v1847 = vmul.f32 %v1768, %v1846
        %v1848 = vrcp.pop %v1805
        %v1849 = vmul.f32 %v1769, %v1848
        %v1850 = vrcp.pop %v1806
        %v1851 = vmul.f32 %v1770, %v1850
        %v1852 = vrcp.pop %v1807
        %v1853 = vmul.f32 %v1771, %v1852
        %v1854 = vrcp.pop %v1808
        %v1855 = vmul.f32 %v1772, %v1854
        %v1856 = vrcp.pop %v1809
        %v1857 = vmul.f32 %v1773, %v1856
        %v1858 = vrcp.pop %v1810
        %v1859 = vmul.f32 %v1774, %v1858
        %v1860 = vrcp.pop %v1811
        %v1861 = vmul.f32 %v1775, %v1860
        %v1862 = vrcp.pop %v1812
        %v1863 = vmul.f32 %v1776, %v1862
        %v1864 = vrcp.pop %v1813
        %v1865 = vmul.f32 %v1777, %v1864
        %v1866 = vrcp.pop %v1814
        %v1867 = vmul.f32 %v1778, %v1866
        %v1868 = vrcp.pop %v1815
        %v1869 = vmul.f32 %v1779, %v1868
        %v1870 = vrcp.pop %v1816
        %v1871 = vmul.f32 %v1780, %v1870
        %v1872 = vrcp.pop %v1817
        %v1873 = vmul.f32 %v1781, %v1872
        %v1874 = vrcp.pop %v1818
        %v1875 = vmul.f32 %v1782, %v1874
        %v1876 = vrcp.pop %v1819
        %v1877 = vmul.f32 %v1783, %v1876
        %v1878 = vrcp.pop %v1820
        %v1879 = vmul.f32 %v1784, %v1878
        %v1880 = vrcp.pop %v1821
        %v1881 = vmul.f32 %v1785, %v1880
        %v1882 = vrcp.pop %v1822
        %v1883 = vmul.f32 %v1786, %v1882
        %v1884 = vrcp.pop %v1823
        %v1885 = vmul.f32 %v1787, %v1884
        %v1886 = vrcp.pop %v1824
        %v1887 = vmul.f32 %v1788, %v1886
        %v1888 = vrcp.pop %v1825
        %v1889 = vmul.f32 %v1789, %v1888
        %v1890 = vrcp.pop %v1826
        %v1891 = vmul.f32 %v1790, %v1890
        %v1892 = vrcp.pop %v1827
        %v1893 = vmul.f32 %v1791, %v1892
        %v1894 = vrcp.pop %v1828
        %v1895 = vmul.f32 %v1792, %v1894
        %v1896 = vrcp.pop %v1829
        %v1897 = vmul.f32 %v1793, %v1896
        %v1898 = vrcp.pop %v1830
        %v1899 = vmul.f32 %v1794, %v1898
        %v1900 = vrcp.pop %v1831
        %v1901 = vmul.f32 %v1795, %v1900
        %v1902 = vrcp.pop %v1832
        %v1903 = vmul.f32 %v1796, %v1902
        %v1904 = vrcp.pop %v1833
        %v1905 = vmul.f32 %v1797, %v1904
        %v1906 = vadd.f32 %v626, %v1835
        %v1907 = vadd.f32 %v627, %v1837
        %v1908 = vadd.f32 %v628, %v1839
        %v1909 = vadd.f32 %v629, %v1841
        %v1910 = vadd.f32 %v630, %v1843
        %v1911 = vadd.f32 %v631, %v1845
        %v1912 = vadd.f32 %v632, %v1847
        %v1913 = vadd.f32 %v633, %v1849
        %v1914 = vadd.f32 %v634, %v1851
        %v1915 = vadd.f32 %v635, %v1853
        %v1916 = vadd.f32 %v636, %v1855
        %v1917 = vadd.f32 %v637, %v1857
        %v1918 = vadd.f32 %v638, %v1859
        %v1919 = vadd.f32 %v639, %v1861
        %v1920 = vadd.f32 %v640, %v1863
        %v1921 = vadd.f32 %v641, %v1865
        %v1922 = vadd.f32 %v642, %v1867
        %v1923 = vadd.f32 %v643, %v1869
        %v1924 = vadd.f32 %v626, %v1871
        %v1925 = vadd.f32 %v627, %v1873
        %v1926 = vadd.f32 %v628, %v1875
        %v1927 = vadd.f32 %v629, %v1877
        %v1928 = vadd.f32 %v630, %v1879
        %v1929 = vadd.f32 %v631, %v1881
        %v1930 = vadd.f32 %v632, %v1883
        %v1931 = vadd.f32 %v633, %v1885
        %v1932 = vadd.f32 %v634, %v1887
        %v1933 = vadd.f32 %v635, %v1889
        %v1934 = vadd.f32 %v636, %v1891
        %v1935 = vadd.f32 %v637, %v1893
        %v1936 = vadd.f32 %v638, %v1895
        %v1937 = vadd.f32 %v639, %v1897
        %v1938 = vadd.f32 %v640, %v1899
        %v1939 = vadd.f32 %v641, %v1901
        %v1940 = vadd.f32 %v642, %v1903
        %v1941 = vadd.f32 %v643, %v1905
        %v1942 = vmul.f32 %v1906, 5.0
        %v1943 = vmul.f32 %v1907, 5.0
        %v1944 = vmul.f32 %v1908, 5.0
        %v1945 = vmul.f32 %v1909, 5.0
        %v1946 = vmul.f32 %v1910, 5.0
        %v1947 = vmul.f32 %v1911, 5.0
        %v1948 = vmul.f32 %v1912, 5.0
        %v1949 = vmul.f32 %v1913, 5.0
        %v1950 = vmul.f32 %v1914, 5.0
        %v1951 = vmul.f32 %v1915, 5.0
        %v1952 = vmul.f32 %v1916, 5.0
        %v1953 = vmul.f32 %v1917, 5.0
        %v1954 = vmul.f32 %v1918, 5.0
        %v1955 = vmul.f32 %v1919, 5.0
        %v1956 = vmul.f32 %v1920, 5.0
        %v1957 = vmul.f32 %v1921, 5.0
        %v1958 = vmul.f32 %v1922, 5.0
        %v1959 = vmul.f32 %v1923, 5.0
        %v1960 = vmul.f32 %v1924, 5.0
        %v1961 = vmul.f32 %v1925, 5.0
        %v1962 = vmul.f32 %v1926, 5.0
        %v1963 = vmul.f32 %v1927, 5.0
        %v1964 = vmul.f32 %v1928, 5.0
        %v1965 = vmul.f32 %v1929, 5.0
        %v1966 = vmul.f32 %v1930, 5.0
        %v1967 = vmul.f32 %v1931, 5.0
        %v1968 = vmul.f32 %v1932, 5.0
        %v1969 = vmul.f32 %v1933, 5.0
        %v1970 = vmul.f32 %v1934, 5.0
        %v1971 = vmul.f32 %v1935, 5.0
        %v1972 = vmul.f32 %v1936, 5.0
        %v1973 = vmul.f32 %v1937, 5.0
        %v1974 = vmul.f32 %v1938, 5.0
        %v1975 = vmul.f32 %v1939, 5.0
        %v1976 = vmul.f32 %v1940, 5.0
        %v1977 = vmul.f32 %v1941, 5.0
        %1978 = vst [vmem:[%s160] sm:$0xff] %v1942
        %1979 = vst [vmem:[%s160 + $0x8] sm:$0xff] %v1943
        %1980 = vst [vmem:[%s160 + $0x10] sm:$0xff] %v1944
        %1981 = vst [vmem:[%s160 + $0x18] sm:$0xff] %v1945
        %1982 = vst [vmem:[%s160 + $0x20] sm:$0xff] %v1946
        %1983 = vst [vmem:[%s160 + $0x28] sm:$0xff] %v1947
        %1984 = vst [vmem:[%s160 + $0x30] sm:$0xff] %v1948
        %1985 = vst [vmem:[%s160 + $0x38] sm:$0xff] %v1949
        %1986 = vst [vmem:[%s160 + $0x40] sm:$0xff] %v1950
        %1987 = vst [vmem:[%s160 + $0x48] sm:$0xff] %v1951
        %1988 = vst [vmem:[%s160 + $0x50] sm:$0xff] %v1952
        %1989 = vst [vmem:[%s160 + $0x58] sm:$0xff] %v1953
        %1990 = vst [vmem:[%s160 + $0x60] sm:$0xff] %v1954
        %1991 = vst [vmem:[%s160 + $0x68] sm:$0xff] %v1955
        %1992 = vst [vmem:[%s160 + $0x70] sm:$0xff] %v1956
        %1993 = vst [vmem:[%s160 + $0x78] sm:$0xff] %v1957
        %1994 = vst [vmem:[%s160 + $0x80] sm:$0xff] %v1958
        %1995 = vst [vmem:[%s160 + $0x88] sm:$0xff] %v1959
        %1996 = vst [vmem:[%s160 + $0x90] sm:$0xff] %v1960
        %1997 = vst [vmem:[%s160 + $0x98] sm:$0xff] %v1961
        %1998 = vst [vmem:[%s160 + $0xa0] sm:$0xff] %v1962
        %1999 = vst [vmem:[%s160 + $0xa8] sm:$0xff] %v1963
        %2000 = vst [vmem:[%s160 + $0xb0] sm:$0xff] %v1964
        %2001 = vst [vmem:[%s160 + $0xb8] sm:$0xff] %v1965
        %2002 = vst [vmem:[%s160 + $0xc0] sm:$0xff] %v1966
        %2003 = vst [vmem:[%s160 + $0xc8] sm:$0xff] %v1967
        %2004 = vst [vmem:[%s160 + $0xd0] sm:$0xff] %v1968
        %2005 = vst [vmem:[%s160 + $0xd8] sm:$0xff] %v1969
        %2006 = vst [vmem:[%s160 + $0xe0] sm:$0xff] %v1970
        %2007 = vst [vmem:[%s160 + $0xe8] sm:$0xff] %v1971
        %2008 = vst [vmem:[%s160 + $0xf0] sm:$0xff] %v1972
        %2009 = vst [vmem:[%s160 + $0xf8] sm:$0xff] %v1973
        %2010 = vst [vmem:[%s160 + $0x100] sm:$0xff] %v1974
        %2011 = vst [vmem:[%s160 + $0x108] sm:$0xff] %v1975
        %2012 = vst [vmem:[%s160 + $0x110] sm:$0xff] %v1976
        %2013 = vst [vmem:[%s160 + $0x118] sm:$0xff] %v1977
        %s2014 = sand.u32 %s68, 1
        %s2015 = scalar_lea.sflag [#allocation4], %s2014
        %s2016 = sand.u32 %s68, 1
        %s2017 = smul.addr %s2016, 288
        %s2018 = scalar_lea.vmem [#allocation5], %s2017
        // Predicated region
        $region29: #{tpu_custom_call.1} parent=23 // pred_check
          %p2019 = pneg %p78
        $region30: #{tpu_custom_call.1} parent=23 // pred_check_branch
          %2021 = sbr.rel (%p2019) target = $region32
        $region31: #{tpu_custom_call.1} parent=23 // pred_region
          %s2022 = smul.u32 2, %s22
          %s2023 = smul.u32 18, %s23
          %s2024 = ssub.s32 3, %s2022
          %p2025 = scmp.lt.s32.totalorder %s2024, 2
          %s2026 = scalar_select %p2025, %s2024, 2
          %s2027 = smul.u32 128, %s2026
          %s2028 = smul.u32 %s2027, 18
          %s2030 = ssub.s32 4608, %s2028
          %2031 = vsyncadd %s2015, %s2030
          %p2032 = scmp.ne.s32.totalorder 0, %s2028
          %s2033 = smul.addr %s2022, 18
          %s2034 = sadd.s32 %s2023, %s2033
          %s2035 = smul.addr %s2034, 128
          %s2036 = scalar_lea.hbm %s1, %s2035
          %s2037 = smul.u32 144, %s2026
          %s2038 = sshll.u32 %s2018, 4
          %s2039 = int_to_ptr.vmem [resolvable:$true] %s2038
          %s2040 = sshll.u32 %s2037, 4
          %2044 = dma.vmem_to_hbm [thread:$0]  (%p2032), %s2039, %s2040, %s2036, %s2015, 2304, 2304, 144
        $region32: #{tpu_custom_call.1} parent=23 // pred_fallthru
          _
      $region24: #{tpu_custom_call.1} parent=5 // pred_fallthru
        _
      %p2045 = scmp.le.s32.totalorder 2, %s13
      // Predicated region
      $region33: #{tpu_custom_call.1} parent=5 // pred_check
        %p2046 = pneg %p2045
      $region34: #{tpu_custom_call.1} parent=5 // pred_check_branch
        %2048 = sbr.rel (%p2046) target = $region36
      $region35: #{tpu_custom_call.1} parent=5 // pred_region
        %s2049 = ssub.s32 %s13, 2
        // Predicated region
        $region37: #{tpu_custom_call.1} parent=35 // pred_check
          %p2050 = pneg %p84
        $region38: #{tpu_custom_call.1} parent=35 // pred_check_branch
          %2052 = sbr.rel (%p2050) target = $region40
        $region39: #{tpu_custom_call.1} parent=35 // pred_region
          %s2053 = sand.u32 %s69, 1
          %s2054 = scalar_lea.sflag [#allocation4], %s2053
          %s2055 = sand.u32 %s69, 1
          %s2056 = smul.addr %s2055, 288
          %s2057 = scalar_lea.vmem [#allocation5], %s2056
          %2058 = dma.done %s2054, 4608
        $region40: #{tpu_custom_call.1} parent=35 // pred_fallthru
          _
      $region36: #{tpu_custom_call.1} parent=5 // pred_fallthru
        _
    $region6: #{tpu_custom_call.1} parent=1 // loop_footer
      %s17 = sadd.s32 1, %s13
    $region7: #{tpu_custom_call.1} parent=1 // loop_footer_branch
      %12 = sbr.rel target = $region3
    $region8: #{tpu_custom_call.1} parent=1 // loop_exit
      _
    %2059 = vsyncpa [#allocation3], 1
    %s2060 = scalar_lea.sflag [#allocation3], 1
    %2061 = vsyncpa %s2060, 1
    %2062 = vsyncpa [#allocation4], 1
    %s2063 = scalar_lea.sflag [#allocation4], 1
    %2064 = vsyncpa %s2063, 1

</llo_original>
